<compile_context>
chip_gen: v6e
topology: v6e:2x2x1
jax: 0.10.0
libtpu: 0.0.40
codegen_flags: <defaults>
</compile_context>

<pallas_src>
import jax
import jax.numpy as jnp
from jax import lax
from jax.experimental import pallas as pl
from jax.experimental.pallas import tpu as pltpu


# Conservative per-call VMEM budget: leaves headroom under v7x's 64 MiB physical VMEM
# and is well inside v5e/v6e's 128 MiB.
DEFAULT_VMEM_BUDGET_BYTES = 56 * 2**20


def _round_up(x, m):
    return (x + m - 1) // m * m


def _tile_vmem_bytes(tile_m, tile_n, dim_in, op_bytes, out_bytes):
    """Conservative VMEM estimate for one grid step: double-buffered x / W / bias / out
    plus the f32 matmul result and GELU epilogue temporaries."""
    return (
        2 * tile_m * dim_in * op_bytes          # x row tile, double buffered
        + 2 * dim_in * 2 * tile_n * op_bytes    # fused W tile, double buffered
        + 2 * 8 * 2 * tile_n * 4                # f32 bias tile (padded to 8 sublanes)
        + 2 * tile_m * tile_n * out_bytes       # output tile, double buffered
        + 3 * tile_m * 2 * tile_n * 4           # f32 acc + GELU temporaries
    )


def _block_spec(shape, index_map, *, buffers=None):
    """BlockSpec with optional explicit buffer count; falls back if unsupported."""
    if buffers is not None and hasattr(pl, "Buffered"):
        try:
            return pl.BlockSpec(shape, index_map, pipeline_mode=pl.Buffered(buffers))
        except TypeError:
            pass
    return pl.BlockSpec(shape, index_map)


def _make_geglu_kernel(approximate):
    def kernel(x_ref, w_ref, b_ref, o_ref):
        # x_ref: (TM, dim_in)     operand-dtype row tile
        # w_ref: (dim_in, 2*TN)   interleaved [W_h tile | W_g tile] for this N tile
        # b_ref: (1, 2*TN)        f32 bias for this N tile
        # o_ref: (TM, TN)         output tile (input dtype)
        acc = jnp.dot(x_ref[...], w_ref[...], preferred_element_type=jnp.float32)
        acc = acc + b_ref[...]                       # bias in f32
        tn = o_ref.shape[-1]
        h = acc[:, :tn]
        g = acc[:, tn:]
        if approximate:
            # tanh-approx GELU routes the transcendental to the EUP slot; useful for
            # thin-dim_in (VALU-bound) layers, especially on v5e.
            gelu_g = jax.nn.gelu(g, approximate=True)
        else:
            # Exact erf GELU in f32 to match torch.nn.functional.gelu default.
            inv_sqrt2 = jnp.float32(0.7071067811865476)
            gelu_g = 0.5 * g * (1.0 + lax.erf(g * inv_sqrt2))
        o_ref[...] = (h * gelu_g).astype(o_ref.dtype)
    return kernel


def prepare_geglu_params(w, b, *, tile_n=None, operand_dtype=jnp.bfloat16,
                         nominal_tile_m=512,
                         vmem_budget_bytes=DEFAULT_VMEM_BUDGET_BYTES):
    """One-time preprocessing of the PyTorch nn.Linear(dim_in, 2*dim_out) parameters.

    w: (2*dim_out, dim_in), b: (2*dim_out,)  -- PyTorch layout.
    Do this once at model-load time, NOT per forward call (hoists the split /
    transpose / pad / cast off the forward path).
    """
    two_dout, dim_in = w.shape
    dim_out = two_dout // 2
    op_bytes = jnp.dtype(operand_dtype).itemsize
    dim_out_min_pad = _round_up(dim_out, 128)

    if tile_n is None:
        # Prefer a fully VMEM-resident fused weight (n_n == 1): x is then read from HBM
        # exactly once instead of n_n times. Otherwise pick the largest lane-aligned
        # tile that fits the budget (large tiles amortize ~0.35 us/grid-step overhead).
        candidates = [dim_out_min_pad] + [t for t in (1024, 512, 256, 128)
                                          if t < dim_out_min_pad]
        tile_n = candidates[-1]
        for cand in candidates:
            if _tile_vmem_bytes(nominal_tile_m, cand, dim_in, op_bytes, 4) \
                    <= vmem_budget_bytes:
                tile_n = cand
                break
    assert tile_n % 128 == 0, "tile_n must be a multiple of 128 lanes"

    dim_out_pad = _round_up(dim_out, tile_n)
    n_n = dim_out_pad // tile_n

    w_h = jnp.transpose(w[:dim_out, :])              # (dim_in, dim_out)
    w_g = jnp.transpose(w[dim_out:, :])              # (dim_in, dim_out)
    b_h = b[:dim_out].astype(jnp.float32)
    b_g = b[dim_out:].astype(jnp.float32)

    pad = dim_out_pad - dim_out
    if pad:
        w_h = jnp.pad(w_h, ((0, 0), (0, pad)))
        w_g = jnp.pad(w_g, ((0, 0), (0, pad)))
        b_h = jnp.pad(b_h, (0, pad))
        b_g = jnp.pad(b_g, (0, pad))

    # Interleave per N-tile: columns [j*2*TN : (j+1)*2*TN] hold [W_h tile j | W_g tile j]
    # so the kernel issues ONE MXU matmul per tile and slices h / gate from the f32 acc.
    w_cat = jnp.concatenate(
        [w_h.reshape(dim_in, n_n, tile_n), w_g.reshape(dim_in, n_n, tile_n)],
        axis=-1,
    ).reshape(dim_in, n_n * 2 * tile_n).astype(operand_dtype)
    b_cat = jnp.concatenate(
        [b_h.reshape(n_n, tile_n), b_g.reshape(n_n, tile_n)],
        axis=-1,
    ).reshape(1, n_n * 2 * tile_n)                   # stays f32 (added after f32 acc)

    # TODO(synk): optional fp8 (e4m3) weight path with per-N-tile scales for v7x.
    return dict(
        w_cat=w_cat, b_cat=b_cat,
        dim_in=dim_in, dim_out=dim_out, dim_out_pad=dim_out_pad,
        tile_n=tile_n, operand_dtype=operand_dtype,
    )


def geglu_pallas(x, params, *, tile_m=512, approximate=False,
                 vmem_budget_bytes=DEFAULT_VMEM_BUDGET_BYTES):
    """GEGLU forward: x (..., dim_in) -> (..., dim_out) using prepared params.

    Callers should jit this wrapper so the pad / cast / slice fuse with neighbours.
    """
    *lead, dim_in = x.shape
    assert dim_in == params["dim_in"]
    dim_out = params["dim_out"]
    dim_out_pad = params["dim_out_pad"]
    tile_n = params["tile_n"]
    op_dtype = params["operand_dtype"]
    w_cat, b_cat = params["w_cat"], params["b_cat"]

    m = 1
    for d in lead:
        m *= d

    out_dtype = x.dtype
    op_bytes = jnp.dtype(op_dtype).itemsize
    out_bytes = jnp.dtype(out_dtype).itemsize

    # M tile: multiple of 16 sublanes (bf16 packing / MXU friendly); clamp for tiny m,
    # then auto-shrink if this shape would exceed the VMEM budget (dim_in is untiled).
    tile_m = max(16, (min(tile_m, _round_up(m, 16)) // 16) * 16)
    while (tile_m > 64
           and _tile_vmem_bytes(tile_m, tile_n, dim_in, op_bytes, out_bytes)
               > vmem_budget_bytes):
        tile_m = max(64, (tile_m // 2 // 16) * 16)
    # TODO(synk): add a K ("arbitrary") grid axis with an f32 VMEM accumulator if a
    # gigantic dim_in ever exceeds the budget even at tile_m=64.

    m_pad = _round_up(m, tile_m)                     # pad -> no ragged last block

    x2d = x.reshape(m, dim_in)
    if m_pad != m:
        x2d = jnp.pad(x2d, ((0, m_pad - m), (0, 0)))
    x2d = x2d.astype(op_dtype)                       # bf16 MXU operands by default

    n_m = m_pad // tile_m
    n_n = dim_out_pad // tile_n
    grid = (n_n, n_m)            # N outer / M inner -> W tile stays VMEM-resident per column

    vmem_est = _tile_vmem_bytes(tile_m, tile_n, dim_in, op_bytes, out_bytes)
    vmem_limit = int(max(vmem_est + (2 << 20), 32 << 20))

    cost = pl.CostEstimate(
        flops=2 * m_pad * dim_in * 2 * dim_out_pad,
        transcendentals=m_pad * dim_out_pad,
        bytes_accessed=(n_n * m_pad * dim_in * op_bytes          # x re-read per N tile
                        + dim_in * 2 * dim_out_pad * op_bytes    # fused W
                        + 2 * dim_out_pad * 4                    # bias
                        + m_pad * dim_out_pad * out_bytes),      # output
    )

    # n_n == 1 -> the fused W / bias block indices are constant: single-buffer them.
    wb_buffers = 1 if n_n == 1 else None

    out2d = pl.pallas_call(
        _make_geglu_kernel(approximate),
        out_shape=jax.ShapeDtypeStruct((m_pad, dim_out_pad), out_dtype),
        grid_spec=pltpu.PrefetchScalarGridSpec(
            num_scalar_prefetch=0,
            grid=grid,
            in_specs=[
                pl.BlockSpec((tile_m, dim_in), lambda j, i: (i, 0)),          # x rows
                _block_spec((dim_in, 2 * tile_n), lambda j, i: (0, j),
                            buffers=wb_buffers),                              # fused W
                _block_spec((1, 2 * tile_n), lambda j, i: (0, j),
                            buffers=wb_buffers),                              # fused bias
            ],
            out_specs=pl.BlockSpec((tile_m, tile_n), lambda j, i: (i, j)),
        ),
        compiler_params=pltpu.CompilerParams(
            # Small (often odd) N axis serialized; large M axis "parallel" so v7x's two
            # TensorCores split rows evenly (only cost: a duplicated W-tile DMA).
            dimension_semantics=("arbitrary", "parallel"),
            vmem_limit_bytes=vmem_limit,
        ),
        cost_estimate=cost,
    )(x2d, w_cat, b_cat)

    if m_pad != m or dim_out_pad != dim_out:
        out2d = out2d[:m, :dim_out]                  # drop row / channel padding
    return out2d.reshape(*lead, dim_out)


def geglu_pallas_from_linear(x, w, b, *, tile_m=512, tile_n=None,
                             operand_dtype=jnp.bfloat16, approximate=False):
    """Convenience wrapper matching the original (x, w, b) signature."""
    params = prepare_geglu_params(w, b, tile_n=tile_n, operand_dtype=operand_dtype)
    return geglu_pallas(x, params, tile_m=tile_m, approximate=approximate)


def geglu_reference(x, w, b, *, precision=None):
    dim_out = w.shape[0] // 2
    proj = jnp.einsum("...i,oi->...o", x, w, precision=precision) + b
    h, g = proj[..., :dim_out], proj[..., dim_out:]
    return h * (0.5 * g * (1.0 + lax.erf(g / jnp.sqrt(2.0))))


if __name__ == "__main__":
    key = jax.random.PRNGKey(0)
    # Small but non-trivial: M = 2*200 = 400 rows, dim_in = 64, dim_out = 256.
    batch, seq, dim_in, dim_out = 2, 200, 64, 256

    k1, k2, k3 = jax.random.split(key, 3)
    x = jax.random.normal(k1, (batch, seq, dim_in), dtype=jnp.float32)
    # Deterministic nn.Linear-like init (uniform in +-1/sqrt(dim_in)).
    bound = 1.0 / (dim_in ** 0.5)
    w = jax.random.uniform(k2, (dim_out * 2, dim_in), jnp.float32, -bound, bound)
    b = jax.random.uniform(k3, (dim_out * 2,), jnp.float32, -bound, bound)

    # One-time parameter preprocessing (hoisted out of the forward path).
    params_auto = prepare_geglu_params(w, b)               # auto tile_n -> resident W
    params_tiled = prepare_geglu_params(w, b, tile_n=128)  # forced 2 N tiles

    # References: exact f32, and f32 on bf16-rounded operands (matches kernel math:
    # bf16 MXU operands, f32 accumulate, f32 bias + exact-erf GELU epilogue).
    ref_exact = geglu_reference(x, w, b, precision=lax.Precision.HIGHEST)
    x_r = x.astype(jnp.bfloat16).astype(jnp.float32)
    w_r = w.astype(jnp.bfloat16).astype(jnp.float32)
    ref_rounded = geglu_reference(x_r, w_r, b, precision=lax.Precision.HIGHEST)

    # (a) jitted forward with auto tiles: fully resident fused W, grid (1, 1).
    fwd = jax.jit(lambda xx: geglu_pallas(xx, params_auto))
    out_a = jax.block_until_ready(fwd(x))

    # (b) resident W streamed over several M tiles: grid (1, 4), M axis "parallel".
    out_b = jax.block_until_ready(geglu_pallas(x, params_auto, tile_m=128))

    # (c) forced N tiling + row padding: grid (2, 4), exercises the tiled/sliced path.
    out_c = jax.block_until_ready(geglu_pallas(x, params_tiled, tile_m=128))

    for out in (out_a, out_b, out_c):
        assert out.shape == (batch, seq, dim_out)
        # Tight check vs. reference computed on the same bf16-rounded operands.
        assert jnp.allclose(out, ref_rounded, atol=1e-4, rtol=1e-4)
        # Loose sanity check vs. the exact f32 reference (bf16 operand drift ~1e-2).
        assert jnp.allclose(out, ref_exact, atol=1e-1, rtol=1e-1)

    print("KERNEL_OK")
</pallas_src>

<mosaic_0001>
module attributes {stable_mosaic.version = 11 : i64} {
  func.func @kernel(%arg0: i32, %arg1: i32, %arg2: memref<400x64xbf16, #tpu.memory_space<vmem>>, %arg3: memref<64x512xbf16, #tpu.memory_space<vmem>>, %arg4: memref<1x512xf32, #tpu.memory_space<vmem>>, %arg5: memref<400x256xf32, #tpu.memory_space<vmem>>) attributes {dimension_semantics = [#tpu.dimension_semantics<arbitrary>, #tpu.dimension_semantics<parallel>], iteration_bounds = array<i64: 1, 1>, scalar_prefetch = 0 : i64, scratch_operands = 0 : i64, tpu.core_type = #tpu.core_type<tc>, window_params = [{transform_indices = @transform_0, window_bounds = array<i64: 400, 64>}, {pipeline_mode = #tpu.pipeline_mode<synchronous>, transform_indices = @transform_1, window_bounds = array<i64: 64, 512>}, {pipeline_mode = #tpu.pipeline_mode<synchronous>, transform_indices = @transform_2, window_bounds = array<i64: 1, 512>}, {transform_indices = @transform_3, window_bounds = array<i64: 400, 256>}]} {
    %c0 = arith.constant 0 : index
    %c0_0 = arith.constant 0 : index
    %0 = vector.load %arg2[%c0, %c0_0] : memref<400x64xbf16, #tpu.memory_space<vmem>>, vector<400x64xbf16>
    %c0_1 = arith.constant 0 : index
    %c0_2 = arith.constant 0 : index
    %1 = vector.load %arg3[%c0_1, %c0_2] : memref<64x512xbf16, #tpu.memory_space<vmem>>, vector<64x512xbf16>
    %cst = arith.constant dense<0.000000e+00> : vector<400x512xf32>
    %2 = tpu.matmul %0, %1, %cst {dimension_numbers = #tpu.dot_dimension_numbers<[1], [0], [0], [1], [0, 0, 1, 1], [], []>} : vector<400x64xbf16>, vector<64x512xbf16>, vector<400x512xf32> -> vector<400x512xf32>
    %c0_3 = arith.constant 0 : index
    %c0_4 = arith.constant 0 : index
    %3 = vector.load %arg4[%c0_3, %c0_4] : memref<1x512xf32, #tpu.memory_space<vmem>>, vector<1x512xf32>
    %4 = vector.broadcast %3 : vector<1x512xf32> to vector<400x512xf32>
    %5 = arith.addf %2, %4 : vector<400x512xf32>
    %6 = vector.extract_strided_slice %5 {offsets = [0, 0], sizes = [400, 256], strides = [1, 1]} : vector<400x512xf32> to vector<400x256xf32>
    %7 = vector.extract_strided_slice %5 {offsets = [0, 256], sizes = [400, 256], strides = [1, 1]} : vector<400x512xf32> to vector<400x256xf32>
    %cst_5 = arith.constant 5.000000e-01 : f32
    %8 = vector.broadcast %cst_5 : f32 to vector<400x256xf32>
    %9 = arith.mulf %8, %7 : vector<400x256xf32>
    %cst_6 = arith.constant 0.707106769 : f32
    %10 = vector.broadcast %cst_6 : f32 to vector<400x256xf32>
    %11 = arith.mulf %7, %10 : vector<400x256xf32>
    %12 = math.erf %11 : vector<400x256xf32>
    %cst_7 = arith.constant 1.000000e+00 : f32
    %13 = vector.broadcast %cst_7 : f32 to vector<400x256xf32>
    %14 = arith.addf %13, %12 : vector<400x256xf32>
    %15 = arith.mulf %9, %14 : vector<400x256xf32>
    %16 = arith.mulf %6, %15 : vector<400x256xf32>
    %c0_8 = arith.constant 0 : index
    %c0_9 = arith.constant 0 : index
    %17 = vector.load %arg5[%c0_8, %c0_9] : memref<400x256xf32, #tpu.memory_space<vmem>>, vector<400x256xf32>
    tpu.vector_store %arg5[%c0_8, %c0_9], %16 {strides = array<i32>} : memref<400x256xf32, #tpu.memory_space<vmem>>, vector<400x256xf32>,
    return
  }
  func.func @transform_0(%arg0: i32, %arg1: i32) -> (i32, i32) {
    %c0_i32 = arith.constant 0 : i32
    %c0_i32_0 = arith.constant 0 : i32
    return %arg1, %c0_i32 : i32, i32
  }
  func.func @transform_1(%arg0: i32, %arg1: i32) -> (i32, i32) {
    %c0_i32 = arith.constant 0 : i32
    %c0_i32_0 = arith.constant 0 : i32
    return %c0_i32, %arg0 : i32, i32
  }
  func.func @transform_2(%arg0: i32, %arg1: i32) -> (i32, i32) {
    %c0_i32 = arith.constant 0 : i32
    %c0_i32_0 = arith.constant 0 : i32
    return %c0_i32, %arg0 : i32, i32
  }
  func.func @transform_3(%arg0: i32, %arg1: i32) -> (i32, i32) {
    %c0_i32 = arith.constant 0 : i32
    return %arg1, %arg0 : i32, i32
  }
}

</mosaic_0001>

<llo_original>
// kernel: _lambda_.1
$region0: #{_lambda_.1}
  #allocation0 [shape = 'u32[]', space=smem, size = 0x4, offset = 0x4, fixed_abs, tag = 'smem constant byte address 0x4 - core index']
  #allocation1 [shape = 'u32[144,128]{1,0:T(1,128)}', space=vmem, size = 0x12000, scoped, tag = 'internal scratch']
  %s0 = inlined_call_operand.vmem [shape: bf16[400,64], index: 0, kind: input, shape index: {}]
  %s1 = inlined_call_operand.vmem [shape: bf16[64,512], index: 1, kind: input, shape index: {}]
  %s2 = inlined_call_operand.vmem [shape: f32[1,512], index: 2, kind: input, shape index: {}]
  %s3 = inlined_call_operand.hbm [shape: f32[400,256], index: 3, kind: output, shape index: {}]
  %s4 = sld [smem:[#allocation0]]
  $region22: #{_lambda_.1} parent=0
    _
  %s6 = ssub.s32 1, %s4
  %s7 = scalar_select 0, %s6, %s4
  $region1: #{_lambda_.1} parent=0
    #allocation2 [shape = 'u8[409600]{0}', space=vmem, size = 0x64000, scoped, tag = 'output window, operand 0, single buffered']
    #allocation3 [shape = 's32[1]{0}', space=sflag, size = 0x4, scoped, tag = 'scoped memory for _lambda_.1']
    %8 = vsyncpa [#allocation3], 0
    // Predicated region
    $region2: #{_lambda_.1} parent=1 // pred_check
      _
    $region3: #{_lambda_.1} parent=1 // pred_check_branch
      %10 = sbr.rel (0) target = $region5
    $region4: #{_lambda_.1} parent=1 // pred_region
      _
    $region5: #{_lambda_.1} parent=1 // pred_fallthru
      _
    // Predicated region
    $region6: #{_lambda_.1} parent=1 // pred_check
      _
    $region7: #{_lambda_.1} parent=1 // pred_check_branch
      %12 = sbr.rel (0) target = $region9
    $region8: #{_lambda_.1} parent=1 // pred_region
      _
    $region9: #{_lambda_.1} parent=1 // pred_fallthru
      _
    // Predicated region
    $region10: #{_lambda_.1} parent=1 // pred_check
      _
    $region11: #{_lambda_.1} parent=1 // pred_check_branch
      %14 = sbr.rel (0) target = $region13
    $region12: #{_lambda_.1} parent=1 // pred_region
      _
    $region13: #{_lambda_.1} parent=1 // pred_fallthru
      _
    %v16 = vld [vmem:[%s0] sm:$0xf]
    %v17 = vld [vmem:[%s0 + $0x4] sm:$0xf]
    %v18 = vld [vmem:[%s0 + $0x8] sm:$0xf]
    %v19 = vld [vmem:[%s0 + $0xc] sm:$0xf]
    %v20 = vld [vmem:[%s0 + $0x10] sm:$0xf]
    %v21 = vld [vmem:[%s0 + $0x14] sm:$0xf]
    %v22 = vld [vmem:[%s0 + $0x18] sm:$0xf]
    %v23 = vld [vmem:[%s0 + $0x1c] sm:$0xf]
    %v24 = vld [vmem:[%s0 + $0x20] sm:$0xf]
    %v25 = vld [vmem:[%s0 + $0x24] sm:$0xf]
    %v26 = vld [vmem:[%s0 + $0x28] sm:$0xf]
    %v27 = vld [vmem:[%s0 + $0x2c] sm:$0xf]
    %v28 = vld [vmem:[%s0 + $0x30] sm:$0xf]
    %v29 = vld [vmem:[%s0 + $0x34] sm:$0xf]
    %v30 = vld [vmem:[%s0 + $0x38] sm:$0xf]
    %v31 = vld [vmem:[%s0 + $0x3c] sm:$0xf]
    %v32 = vld [vmem:[%s0 + $0x40] sm:$0xf]
    %v33 = vld [vmem:[%s0 + $0x44] sm:$0xf]
    %v34 = vld [vmem:[%s0 + $0x48] sm:$0xf]
    %v35 = vld [vmem:[%s0 + $0x4c] sm:$0xf]
    %v36 = vld [vmem:[%s0 + $0x50] sm:$0xf]
    %v37 = vld [vmem:[%s0 + $0x54] sm:$0xf]
    %v38 = vld [vmem:[%s0 + $0x58] sm:$0xf]
    %v39 = vld [vmem:[%s0 + $0x5c] sm:$0xf]
    %v40 = vld [vmem:[%s0 + $0x60] sm:$0xf]
    %v41 = vld [vmem:[%s0 + $0x64] sm:$0xf]
    %v42 = vld [vmem:[%s0 + $0x68] sm:$0xf]
    %v43 = vld [vmem:[%s0 + $0x6c] sm:$0xf]
    %v44 = vld [vmem:[%s0 + $0x70] sm:$0xf]
    %v45 = vld [vmem:[%s0 + $0x74] sm:$0xf]
    %v46 = vld [vmem:[%s0 + $0x78] sm:$0xf]
    %v47 = vld [vmem:[%s0 + $0x7c] sm:$0xf]
    %v48 = vld [vmem:[%s0 + $0x80] sm:$0xf]
    %v49 = vld [vmem:[%s0 + $0x84] sm:$0xf]
    %v50 = vld [vmem:[%s0 + $0x88] sm:$0xf]
    %v51 = vld [vmem:[%s0 + $0x8c] sm:$0xf]
    %v52 = vld [vmem:[%s0 + $0x90] sm:$0xf]
    %v53 = vld [vmem:[%s0 + $0x94] sm:$0xf]
    %v54 = vld [vmem:[%s0 + $0x98] sm:$0xf]
    %v55 = vld [vmem:[%s0 + $0x9c] sm:$0xf]
    %v56 = vld [vmem:[%s0 + $0xa0] sm:$0xf]
    %v57 = vld [vmem:[%s0 + $0xa4] sm:$0xf]
    %v58 = vld [vmem:[%s0 + $0xa8] sm:$0xf]
    %v59 = vld [vmem:[%s0 + $0xac] sm:$0xf]
    %v60 = vld [vmem:[%s0 + $0xb0] sm:$0xf]
    %v61 = vld [vmem:[%s0 + $0xb4] sm:$0xf]
    %v62 = vld [vmem:[%s0 + $0xb8] sm:$0xf]
    %v63 = vld [vmem:[%s0 + $0xbc] sm:$0xf]
    %v64 = vld [vmem:[%s0 + $0xc0] sm:$0xf]
    %v65 = vld [vmem:[%s0 + $0xc4] sm:$0xf]
    %v66 = vld [vmem:[%s1] sm:$0xff]
    %v67 = vld [vmem:[%s1 + $0x8] sm:$0xff]
    %v68 = vld [vmem:[%s1 + $0x10] sm:$0xff]
    %v69 = vld [vmem:[%s1 + $0x18] sm:$0xff]
    %v70 = vld [vmem:[%s1 + $0x20] sm:$0xff]
    %v71 = vld [vmem:[%s1 + $0x28] sm:$0xff]
    %v72 = vld [vmem:[%s1 + $0x30] sm:$0xff]
    %v73 = vld [vmem:[%s1 + $0x38] sm:$0xff]
    %v74 = vld [vmem:[%s1 + $0x40] sm:$0xff]
    %v75 = vld [vmem:[%s1 + $0x48] sm:$0xff]
    %v76 = vld [vmem:[%s1 + $0x50] sm:$0xff]
    %v77 = vld [vmem:[%s1 + $0x58] sm:$0xff]
    %v78 = vld [vmem:[%s1 + $0x60] sm:$0xff]
    %v79 = vld [vmem:[%s1 + $0x68] sm:$0xff]
    %v80 = vld [vmem:[%s1 + $0x70] sm:$0xff]
    %v81 = vld [vmem:[%s1 + $0x78] sm:$0xff]
    %v82 = vld [vmem:[%s2] sm:$0xf]
    %v84 = vlaneseq
    %v85 = vshrl.u32 %v84, 7
    %v86 = vsub.s32 0, %v85
    %v87 = vrot.slane %v82, %v86
    %v88 = vlaneseq
    %v89 = vshrl.u32 %v88, 7
    %v90 = vsub.s32 1, %v89
    %v91 = vrot.slane %v82, %v90
    %v92 = vlaneseq
    %v93 = vshrl.u32 %v92, 7
    %v94 = vsub.s32 2, %v93
    %v95 = vrot.slane %v82, %v94
    %v96 = vlaneseq
    %v97 = vshrl.u32 %v96, 7
    %v98 = vsub.s32 3, %v97
    %v99 = vrot.slane %v82, %v98
    %v154 = vunpack.c.l.b16 %v16
    %v155 = vunpack.c.l.b16 %v17
    %v156 = vunpack.c.l.b16 %v18
    %v157 = vunpack.c.l.b16 %v19
    %v158 = vunpack.c.l.b16 %v20
    %v159 = vunpack.c.l.b16 %v21
    %v160 = vunpack.c.l.b16 %v22
    %v161 = vunpack.c.l.b16 %v23
    %v162 = vunpack.c.l.b16 %v24
    %v163 = vunpack.c.l.b16 %v25
    %v164 = vunpack.c.l.b16 %v26
    %v165 = vunpack.c.l.b16 %v27
    %v166 = vunpack.c.l.b16 %v28
    %v167 = vunpack.c.l.b16 %v29
    %v168 = vunpack.c.l.b16 %v30
    %v169 = vunpack.c.l.b16 %v31
    %v170 = vunpack.c.l.b16 %v32
    %v171 = vunpack.c.l.b16 %v33
    %v172 = vunpack.c.l.b16 %v34
    %v173 = vunpack.c.l.b16 %v35
    %v174 = vunpack.c.l.b16 %v36
    %v175 = vunpack.c.l.b16 %v37
    %v176 = vunpack.c.l.b16 %v38
    %v177 = vunpack.c.l.b16 %v39
    %v178 = vunpack.c.l.b16 %v40
    %v179 = vunpack.c.l.b16 %v41
    %v180 = vunpack.c.l.b16 %v42
    %v181 = vunpack.c.l.b16 %v43
    %v182 = vunpack.c.l.b16 %v44
    %v183 = vunpack.c.l.b16 %v45
    %v184 = vunpack.c.l.b16 %v46
    %v185 = vunpack.c.l.b16 %v47
    %v186 = vunpack.c.l.b16 %v48
    %v187 = vunpack.c.l.b16 %v49
    %v188 = vunpack.c.l.b16 %v50
    %v189 = vunpack.c.l.b16 %v51
    %v190 = vunpack.c.l.b16 %v52
    %v191 = vunpack.c.l.b16 %v53
    %v192 = vunpack.c.l.b16 %v54
    %v193 = vunpack.c.l.b16 %v55
    %v194 = vunpack.c.l.b16 %v56
    %v195 = vunpack.c.l.b16 %v57
    %v196 = vunpack.c.l.b16 %v58
    %v197 = vunpack.c.l.b16 %v59
    %v198 = vunpack.c.l.b16 %v60
    %v199 = vunpack.c.l.b16 %v61
    %v200 = vunpack.c.l.b16 %v62
    %v201 = vunpack.c.l.b16 %v63
    %v202 = vunpack.c.l.b16 %v64
    %v203 = vunpack.c.l.b16 %v65
    %v204 = vpack.c.b16 %v155, %v154
    %v205 = vpack.c.b16 %v157, %v156
    %v206 = vpack.c.b16 %v159, %v158
    %v207 = vpack.c.b16 %v161, %v160
    %v208 = vpack.c.b16 %v163, %v162
    %v209 = vpack.c.b16 %v165, %v164
    %v210 = vpack.c.b16 %v167, %v166
    %v211 = vpack.c.b16 %v169, %v168
    %v212 = vpack.c.b16 %v171, %v170
    %v213 = vpack.c.b16 %v173, %v172
    %v214 = vpack.c.b16 %v175, %v174
    %v215 = vpack.c.b16 %v177, %v176
    %v216 = vpack.c.b16 %v179, %v178
    %v217 = vpack.c.b16 %v181, %v180
    %v218 = vpack.c.b16 %v183, %v182
    %v219 = vpack.c.b16 %v185, %v184
    %v220 = vpack.c.b16 %v187, %v186
    %v221 = vpack.c.b16 %v189, %v188
    %v222 = vpack.c.b16 %v191, %v190
    %v223 = vpack.c.b16 %v193, %v192
    %v224 = vpack.c.b16 %v195, %v194
    %v225 = vpack.c.b16 %v197, %v196
    %v226 = vpack.c.b16 %v199, %v198
    %v227 = vpack.c.b16 %v201, %v200
    %v228 = vpack.c.b16 %v203, %v202
    %v245 = vunpack.c.l.b16 %v66
    %v246 = vunpack.c.h.b16 %v66
    %v247 = vunpack.c.l.b16 %v67
    %v248 = vunpack.c.h.b16 %v67
    %v249 = vunpack.c.l.b16 %v68
    %v250 = vunpack.c.h.b16 %v68
    %v251 = vunpack.c.l.b16 %v69
    %v252 = vunpack.c.h.b16 %v69
    %v253 = vunpack.c.l.b16 %v70
    %v254 = vunpack.c.h.b16 %v70
    %v255 = vunpack.c.l.b16 %v71
    %v256 = vunpack.c.h.b16 %v71
    %v257 = vunpack.c.l.b16 %v72
    %v258 = vunpack.c.h.b16 %v72
    %v259 = vunpack.c.l.b16 %v73
    %v260 = vunpack.c.h.b16 %v73
    %v261 = vunpack.c.l.b16 %v74
    %v262 = vunpack.c.h.b16 %v74
    %v263 = vunpack.c.l.b16 %v75
    %v264 = vunpack.c.h.b16 %v75
    %v265 = vunpack.c.l.b16 %v76
    %v266 = vunpack.c.h.b16 %v76
    %v267 = vunpack.c.l.b16 %v77
    %v268 = vunpack.c.h.b16 %v77
    %v269 = vunpack.c.l.b16 %v78
    %v270 = vunpack.c.h.b16 %v78
    %v271 = vunpack.c.l.b16 %v79
    %v272 = vunpack.c.h.b16 %v79
    %v273 = vunpack.c.l.b16 %v80
    %v274 = vunpack.c.h.b16 %v80
    %v275 = vunpack.c.l.b16 %v81
    %v276 = vunpack.c.h.b16 %v81
    %v277 = vpack.c.b16 %v249, %v245
    %v278 = vpack.c.b16 %v250, %v246
    %v279 = vpack.c.b16 %v251, %v247
    %v280 = vpack.c.b16 %v252, %v248
    %v281 = vpack.c.b16 %v257, %v253
    %v282 = vpack.c.b16 %v258, %v254
    %v283 = vpack.c.b16 %v259, %v255
    %v284 = vpack.c.b16 %v260, %v256
    %v285 = vpack.c.b16 %v265, %v261
    %v286 = vpack.c.b16 %v266, %v262
    %v287 = vpack.c.b16 %v267, %v263
    %v288 = vpack.c.b16 %v268, %v264
    %v289 = vpack.c.b16 %v273, %v269
    %v290 = vpack.c.b16 %v274, %v270
    %v291 = vpack.c.b16 %v275, %v271
    %v292 = vpack.c.b16 %v276, %v272
    %vm309 = vcmask 523264
    %v311 = vsel %vm309, %v204, 0
    %v314 = vsel %vm309, %v205, 0
    %v317 = vsel %vm309, %v206, 0
    %v320 = vsel %vm309, %v207, 0
    %v323 = vsel %vm309, %v208, 0
    %v326 = vsel %vm309, %v209, 0
    %v329 = vsel %vm309, %v210, 0
    %v332 = vsel %vm309, %v211, 0
    %v335 = vsel %vm309, %v212, 0
    %v338 = vsel %vm309, %v213, 0
    %v341 = vsel %vm309, %v214, 0
    %v344 = vsel %vm309, %v215, 0
    %v347 = vsel %vm309, %v216, 0
    %v350 = vsel %vm309, %v217, 0
    %v353 = vsel %vm309, %v218, 0
    %v356 = vsel %vm309, %v219, 0
    %v359 = vsel %vm309, %v220, 0
    %v362 = vsel %vm309, %v221, 0
    %v365 = vsel %vm309, %v222, 0
    %v368 = vsel %vm309, %v223, 0
    %v371 = vsel %vm309, %v224, 0
    %v374 = vsel %vm309, %v225, 0
    %v377 = vsel %vm309, %v226, 0
    %v380 = vsel %vm309, %v227, 0
    %v383 = vsel %vm309, %v228, 0
    %385 = vmatprep.subr.bf16.mxu0 0
    %386 = vmatpush1.bf16.msra.mxu0 0
    %387 = vmatprep.subr.bf16.mxu0 0
    %388 = vmatpush1.bf16.msra.mxu0 0
    %389 = vmatprep.subr.bf16.mxu0 0
    %390 = vmatpush1.bf16.msra.mxu0 0
    %391 = vmatprep.subr.bf16.mxu0 0
    %392 = vmatpush1.bf16.msra.mxu0 0
    %393 = vmatprep.subr.bf16.mxu0 %v290
    %394 = vmatpush1.bf16.msra.mxu0 %v289
    %395 = vmatprep.subr.bf16.mxu0 %v286
    %396 = vmatpush1.bf16.msra.mxu0 %v285
    %397 = vmatprep.subr.bf16.mxu0 %v282
    %398 = vmatpush1.bf16.msra.mxu0 %v281
    %399 = vmatprep.subr.bf16.mxu0 %v278
    %400 = vmatpush1.bf16.msra.mxu0 %v277
    %401 = vmatprep.subr.bf16.mxu0 0
    %402 = vmatpush2.bf16.msra.mxu0 0
    %403 = vmatprep.subr.bf16.mxu0 0
    %404 = vmatpush2.bf16.msra.mxu0 0
    %405 = vmatprep.subr.bf16.mxu0 0
    %406 = vmatpush2.bf16.msra.mxu0 0
    %407 = vmatprep.subr.bf16.mxu0 0
    %408 = vmatpush2.bf16.msra.mxu0 0
    %409 = vmatprep.subr.bf16.mxu0 0
    %410 = vmatpush2.bf16.msra.mxu0 0
    %411 = vmatprep.subr.bf16.mxu0 0
    %412 = vmatpush2.bf16.msra.mxu0 0
    %413 = vmatprep.subr.bf16.mxu0 0
    %414 = vmatpush2.bf16.msra.mxu0 0
    %415 = vmatprep.subr.bf16.mxu0 0
    %416 = vmatpush2.bf16.msra.mxu0 0
    %417 = vmatprep.mubr.bf16.mxu0 0
    %418 = vmatmul.mubr.bf16.gmra.mxu0 %v311
    %v419 = vpop.f32.mrf.mxu0
    %v420 = vadd.f32 %v87, %v419
    %v421 = vpop.f32.mrf.mxu0
    %v422 = vadd.f32 %v91, %v421
    %v423 = vpop.f32.mrf.mxu0
    %v424 = vadd.f32 %v87, %v423
    %v425 = vpop.f32.mrf.mxu0
    %v426 = vadd.f32 %v91, %v425
    %427 = vmatprep.mubr.bf16.mxu0 0
    %428 = vmatmul.mubr.bf16.gmra.mxu0 %v314
    %v429 = vpop.f32.mrf.mxu0
    %v430 = vadd.f32 %v87, %v429
    %v431 = vpop.f32.mrf.mxu0
    %v432 = vadd.f32 %v91, %v431
    %v433 = vpop.f32.mrf.mxu0
    %v434 = vadd.f32 %v87, %v433
    %v435 = vpop.f32.mrf.mxu0
    %v436 = vadd.f32 %v91, %v435
    %437 = vmatprep.mubr.bf16.mxu0 0
    %438 = vmatmul.mubr.bf16.gmra.mxu0 %v317
    %v439 = vpop.f32.mrf.mxu0
    %v440 = vadd.f32 %v87, %v439
    %v441 = vpop.f32.mrf.mxu0
    %v442 = vadd.f32 %v91, %v441
    %v443 = vpop.f32.mrf.mxu0
    %v444 = vadd.f32 %v87, %v443
    %v445 = vpop.f32.mrf.mxu0
    %v446 = vadd.f32 %v91, %v445
    %447 = vmatprep.mubr.bf16.mxu0 0
    %448 = vmatmul.mubr.bf16.gmra.mxu0 %v320
    %v449 = vpop.f32.mrf.mxu0
    %v450 = vadd.f32 %v87, %v449
    %v451 = vpop.f32.mrf.mxu0
    %v452 = vadd.f32 %v91, %v451
    %v453 = vpop.f32.mrf.mxu0
    %v454 = vadd.f32 %v87, %v453
    %v455 = vpop.f32.mrf.mxu0
    %v456 = vadd.f32 %v91, %v455
    %457 = vmatprep.mubr.bf16.mxu0 0
    %458 = vmatmul.mubr.bf16.gmra.mxu0 %v323
    %v459 = vpop.f32.mrf.mxu0
    %v460 = vadd.f32 %v87, %v459
    %v461 = vpop.f32.mrf.mxu0
    %v462 = vadd.f32 %v91, %v461
    %v463 = vpop.f32.mrf.mxu0
    %v464 = vadd.f32 %v87, %v463
    %v465 = vpop.f32.mrf.mxu0
    %v466 = vadd.f32 %v91, %v465
    %467 = vmatprep.mubr.bf16.mxu0 0
    %468 = vmatmul.mubr.bf16.gmra.mxu0 %v326
    %v469 = vpop.f32.mrf.mxu0
    %v470 = vadd.f32 %v87, %v469
    %v471 = vpop.f32.mrf.mxu0
    %v472 = vadd.f32 %v91, %v471
    %v473 = vpop.f32.mrf.mxu0
    %v474 = vadd.f32 %v87, %v473
    %v475 = vpop.f32.mrf.mxu0
    %v476 = vadd.f32 %v91, %v475
    %477 = vmatprep.mubr.bf16.mxu0 0
    %478 = vmatmul.mubr.bf16.gmra.mxu0 %v329
    %v479 = vpop.f32.mrf.mxu0
    %v480 = vadd.f32 %v87, %v479
    %v481 = vpop.f32.mrf.mxu0
    %v482 = vadd.f32 %v91, %v481
    %v483 = vpop.f32.mrf.mxu0
    %v484 = vadd.f32 %v87, %v483
    %v485 = vpop.f32.mrf.mxu0
    %v486 = vadd.f32 %v91, %v485
    %487 = vmatprep.mubr.bf16.mxu0 0
    %488 = vmatmul.mubr.bf16.gmra.mxu0 %v332
    %v489 = vpop.f32.mrf.mxu0
    %v490 = vadd.f32 %v87, %v489
    %v491 = vpop.f32.mrf.mxu0
    %v492 = vadd.f32 %v91, %v491
    %v493 = vpop.f32.mrf.mxu0
    %v494 = vadd.f32 %v87, %v493
    %v495 = vpop.f32.mrf.mxu0
    %v496 = vadd.f32 %v91, %v495
    %497 = vmatprep.mubr.bf16.mxu0 0
    %498 = vmatmul.mubr.bf16.gmra.mxu0 %v335
    %v499 = vpop.f32.mrf.mxu0
    %v500 = vadd.f32 %v87, %v499
    %v501 = vpop.f32.mrf.mxu0
    %v502 = vadd.f32 %v91, %v501
    %v503 = vpop.f32.mrf.mxu0
    %v504 = vadd.f32 %v87, %v503
    %v505 = vpop.f32.mrf.mxu0
    %v506 = vadd.f32 %v91, %v505
    %507 = vmatprep.mubr.bf16.mxu0 0
    %508 = vmatmul.mubr.bf16.gmra.mxu0 %v338
    %v509 = vpop.f32.mrf.mxu0
    %v510 = vadd.f32 %v87, %v509
    %v511 = vpop.f32.mrf.mxu0
    %v512 = vadd.f32 %v91, %v511
    %v513 = vpop.f32.mrf.mxu0
    %v514 = vadd.f32 %v87, %v513
    %v515 = vpop.f32.mrf.mxu0
    %v516 = vadd.f32 %v91, %v515
    %517 = vmatprep.mubr.bf16.mxu0 0
    %518 = vmatmul.mubr.bf16.gmra.mxu0 %v341
    %v519 = vpop.f32.mrf.mxu0
    %v520 = vadd.f32 %v87, %v519
    %v521 = vpop.f32.mrf.mxu0
    %v522 = vadd.f32 %v91, %v521
    %v523 = vpop.f32.mrf.mxu0
    %v524 = vadd.f32 %v87, %v523
    %v525 = vpop.f32.mrf.mxu0
    %v526 = vadd.f32 %v91, %v525
    %527 = vmatprep.mubr.bf16.mxu0 0
    %528 = vmatmul.mubr.bf16.gmra.mxu0 %v344
    %v529 = vpop.f32.mrf.mxu0
    %v530 = vadd.f32 %v87, %v529
    %v531 = vpop.f32.mrf.mxu0
    %v532 = vadd.f32 %v91, %v531
    %v533 = vpop.f32.mrf.mxu0
    %v534 = vadd.f32 %v87, %v533
    %v535 = vpop.f32.mrf.mxu0
    %v536 = vadd.f32 %v91, %v535
    %537 = vmatprep.mubr.bf16.mxu0 0
    %538 = vmatmul.mubr.bf16.gmra.mxu0 %v347
    %v539 = vpop.f32.mrf.mxu0
    %v540 = vadd.f32 %v87, %v539
    %v541 = vpop.f32.mrf.mxu0
    %v542 = vadd.f32 %v91, %v541
    %v543 = vpop.f32.mrf.mxu0
    %v544 = vadd.f32 %v87, %v543
    %v545 = vpop.f32.mrf.mxu0
    %v546 = vadd.f32 %v91, %v545
    %547 = vmatprep.mubr.bf16.mxu0 0
    %548 = vmatmul.mubr.bf16.gmra.mxu0 %v350
    %v549 = vpop.f32.mrf.mxu0
    %v550 = vadd.f32 %v87, %v549
    %v551 = vpop.f32.mrf.mxu0
    %v552 = vadd.f32 %v91, %v551
    %v553 = vpop.f32.mrf.mxu0
    %v554 = vadd.f32 %v87, %v553
    %v555 = vpop.f32.mrf.mxu0
    %v556 = vadd.f32 %v91, %v555
    %557 = vmatprep.mubr.bf16.mxu0 0
    %558 = vmatmul.mubr.bf16.gmra.mxu0 %v353
    %v559 = vpop.f32.mrf.mxu0
    %v560 = vadd.f32 %v87, %v559
    %v561 = vpop.f32.mrf.mxu0
    %v562 = vadd.f32 %v91, %v561
    %v563 = vpop.f32.mrf.mxu0
    %v564 = vadd.f32 %v87, %v563
    %v565 = vpop.f32.mrf.mxu0
    %v566 = vadd.f32 %v91, %v565
    %567 = vmatprep.mubr.bf16.mxu0 0
    %568 = vmatmul.mubr.bf16.gmra.mxu0 %v356
    %v569 = vpop.f32.mrf.mxu0
    %v570 = vadd.f32 %v87, %v569
    %v571 = vpop.f32.mrf.mxu0
    %v572 = vadd.f32 %v91, %v571
    %v573 = vpop.f32.mrf.mxu0
    %v574 = vadd.f32 %v87, %v573
    %v575 = vpop.f32.mrf.mxu0
    %v576 = vadd.f32 %v91, %v575
    %577 = vmatprep.mubr.bf16.mxu0 0
    %578 = vmatmul.mubr.bf16.gmra.mxu0 %v359
    %v579 = vpop.f32.mrf.mxu0
    %v580 = vadd.f32 %v87, %v579
    %v581 = vpop.f32.mrf.mxu0
    %v582 = vadd.f32 %v91, %v581
    %v583 = vpop.f32.mrf.mxu0
    %v584 = vadd.f32 %v87, %v583
    %v585 = vpop.f32.mrf.mxu0
    %v586 = vadd.f32 %v91, %v585
    %587 = vmatprep.mubr.bf16.mxu0 0
    %588 = vmatmul.mubr.bf16.gmra.mxu0 %v362
    %v589 = vpop.f32.mrf.mxu0
    %v590 = vadd.f32 %v87, %v589
    %v591 = vpop.f32.mrf.mxu0
    %v592 = vadd.f32 %v91, %v591
    %v593 = vpop.f32.mrf.mxu0
    %v594 = vadd.f32 %v87, %v593
    %v595 = vpop.f32.mrf.mxu0
    %v596 = vadd.f32 %v91, %v595
    %597 = vmatprep.mubr.bf16.mxu0 0
    %598 = vmatmul.mubr.bf16.gmra.mxu0 %v365
    %v599 = vpop.f32.mrf.mxu0
    %v600 = vadd.f32 %v87, %v599
    %v601 = vpop.f32.mrf.mxu0
    %v602 = vadd.f32 %v91, %v601
    %v603 = vpop.f32.mrf.mxu0
    %v604 = vadd.f32 %v87, %v603
    %v605 = vpop.f32.mrf.mxu0
    %v606 = vadd.f32 %v91, %v605
    %607 = vmatprep.mubr.bf16.mxu0 0
    %608 = vmatmul.mubr.bf16.gmra.mxu0 %v368
    %v609 = vpop.f32.mrf.mxu0
    %v610 = vadd.f32 %v87, %v609
    %v611 = vpop.f32.mrf.mxu0
    %v612 = vadd.f32 %v91, %v611
    %v613 = vpop.f32.mrf.mxu0
    %v614 = vadd.f32 %v87, %v613
    %v615 = vpop.f32.mrf.mxu0
    %v616 = vadd.f32 %v91, %v615
    %617 = vmatprep.mubr.bf16.mxu0 0
    %618 = vmatmul.mubr.bf16.gmra.mxu0 %v371
    %v619 = vpop.f32.mrf.mxu0
    %v620 = vadd.f32 %v87, %v619
    %v621 = vpop.f32.mrf.mxu0
    %v622 = vadd.f32 %v91, %v621
    %v623 = vpop.f32.mrf.mxu0
    %v624 = vadd.f32 %v87, %v623
    %v625 = vpop.f32.mrf.mxu0
    %v626 = vadd.f32 %v91, %v625
    %627 = vmatprep.mubr.bf16.mxu0 0
    %628 = vmatmul.mubr.bf16.gmra.mxu0 %v374
    %v629 = vpop.f32.mrf.mxu0
    %v630 = vadd.f32 %v87, %v629
    %v631 = vpop.f32.mrf.mxu0
    %v632 = vadd.f32 %v91, %v631
    %v633 = vpop.f32.mrf.mxu0
    %v634 = vadd.f32 %v87, %v633
    %v635 = vpop.f32.mrf.mxu0
    %v636 = vadd.f32 %v91, %v635
    %637 = vmatprep.mubr.bf16.mxu0 0
    %638 = vmatmul.mubr.bf16.gmra.mxu0 %v377
    %v639 = vpop.f32.mrf.mxu0
    %v640 = vadd.f32 %v87, %v639
    %v641 = vpop.f32.mrf.mxu0
    %v642 = vadd.f32 %v91, %v641
    %v643 = vpop.f32.mrf.mxu0
    %v644 = vadd.f32 %v87, %v643
    %v645 = vpop.f32.mrf.mxu0
    %v646 = vadd.f32 %v91, %v645
    %647 = vmatprep.mubr.bf16.mxu0 0
    %648 = vmatmul.mubr.bf16.gmra.mxu0 %v380
    %v649 = vpop.f32.mrf.mxu0
    %v650 = vadd.f32 %v87, %v649
    %v651 = vpop.f32.mrf.mxu0
    %v652 = vadd.f32 %v91, %v651
    %v653 = vpop.f32.mrf.mxu0
    %v654 = vadd.f32 %v87, %v653
    %v655 = vpop.f32.mrf.mxu0
    %v656 = vadd.f32 %v91, %v655
    %657 = vmatprep.mubr.bf16.mxu0 0
    %658 = vmatmul.mubr.bf16.gmra.mxu0 %v383
    %v659 = vpop.f32.mrf.mxu0
    %v660 = vadd.f32 %v87, %v659
    %v661 = vpop.f32.mrf.mxu0
    %v662 = vadd.f32 %v91, %v661
    %v663 = vpop.f32.mrf.mxu0
    %v664 = vadd.f32 %v87, %v663
    %v665 = vpop.f32.mrf.mxu0
    %v666 = vadd.f32 %v91, %v665
    %667 = vdwg.mxu0
    %668 = vmatprep.subr.bf16.mxu0 0
    %669 = vmatpush1.bf16.msra.mxu0 0
    %670 = vmatprep.subr.bf16.mxu0 0
    %671 = vmatpush1.bf16.msra.mxu0 0
    %672 = vmatprep.subr.bf16.mxu0 0
    %673 = vmatpush1.bf16.msra.mxu0 0
    %674 = vmatprep.subr.bf16.mxu0 0
    %675 = vmatpush1.bf16.msra.mxu0 0
    %676 = vmatprep.subr.bf16.mxu0 %v292
    %677 = vmatpush1.bf16.msra.mxu0 %v291
    %678 = vmatprep.subr.bf16.mxu0 %v288
    %679 = vmatpush1.bf16.msra.mxu0 %v287
    %680 = vmatprep.subr.bf16.mxu0 %v284
    %681 = vmatpush1.bf16.msra.mxu0 %v283
    %682 = vmatprep.subr.bf16.mxu0 %v280
    %683 = vmatpush1.bf16.msra.mxu0 %v279
    %684 = vmatprep.subr.bf16.mxu0 0
    %685 = vmatpush2.bf16.msra.mxu0 0
    %686 = vmatprep.subr.bf16.mxu0 0
    %687 = vmatpush2.bf16.msra.mxu0 0
    %688 = vmatprep.subr.bf16.mxu0 0
    %689 = vmatpush2.bf16.msra.mxu0 0
    %690 = vmatprep.subr.bf16.mxu0 0
    %691 = vmatpush2.bf16.msra.mxu0 0
    %692 = vmatprep.subr.bf16.mxu0 0
    %693 = vmatpush2.bf16.msra.mxu0 0
    %694 = vmatprep.subr.bf16.mxu0 0
    %695 = vmatpush2.bf16.msra.mxu0 0
    %696 = vmatprep.subr.bf16.mxu0 0
    %697 = vmatpush2.bf16.msra.mxu0 0
    %698 = vmatprep.subr.bf16.mxu0 0
    %699 = vmatpush2.bf16.msra.mxu0 0
    %700 = vmatprep.mubr.bf16.mxu0 0
    %701 = vmatmul.mubr.bf16.gmra.mxu0 %v311
    %v702 = vpop.f32.mrf.mxu0
    %v703 = vadd.f32 %v95, %v702
    %v704 = vpop.f32.mrf.mxu0
    %v705 = vadd.f32 %v99, %v704
    %v706 = vpop.f32.mrf.mxu0
    %v707 = vadd.f32 %v95, %v706
    %v708 = vpop.f32.mrf.mxu0
    %v709 = vadd.f32 %v99, %v708
    %710 = vmatprep.mubr.bf16.mxu0 0
    %711 = vmatmul.mubr.bf16.gmra.mxu0 %v314
    %v712 = vpop.f32.mrf.mxu0
    %v713 = vadd.f32 %v95, %v712
    %v714 = vpop.f32.mrf.mxu0
    %v715 = vadd.f32 %v99, %v714
    %v716 = vpop.f32.mrf.mxu0
    %v717 = vadd.f32 %v95, %v716
    %v718 = vpop.f32.mrf.mxu0
    %v719 = vadd.f32 %v99, %v718
    %720 = vmatprep.mubr.bf16.mxu0 0
    %721 = vmatmul.mubr.bf16.gmra.mxu0 %v317
    %v722 = vpop.f32.mrf.mxu0
    %v723 = vadd.f32 %v95, %v722
    %v724 = vpop.f32.mrf.mxu0
    %v725 = vadd.f32 %v99, %v724
    %v726 = vpop.f32.mrf.mxu0
    %v727 = vadd.f32 %v95, %v726
    %v728 = vpop.f32.mrf.mxu0
    %v729 = vadd.f32 %v99, %v728
    %730 = vmatprep.mubr.bf16.mxu0 0
    %731 = vmatmul.mubr.bf16.gmra.mxu0 %v320
    %v732 = vpop.f32.mrf.mxu0
    %v733 = vadd.f32 %v95, %v732
    %v734 = vpop.f32.mrf.mxu0
    %v735 = vadd.f32 %v99, %v734
    %v736 = vpop.f32.mrf.mxu0
    %v737 = vadd.f32 %v95, %v736
    %v738 = vpop.f32.mrf.mxu0
    %v739 = vadd.f32 %v99, %v738
    %740 = vmatprep.mubr.bf16.mxu0 0
    %741 = vmatmul.mubr.bf16.gmra.mxu0 %v323
    %v742 = vpop.f32.mrf.mxu0
    %v743 = vadd.f32 %v95, %v742
    %v744 = vpop.f32.mrf.mxu0
    %v745 = vadd.f32 %v99, %v744
    %v746 = vpop.f32.mrf.mxu0
    %v747 = vadd.f32 %v95, %v746
    %v748 = vpop.f32.mrf.mxu0
    %v749 = vadd.f32 %v99, %v748
    %750 = vmatprep.mubr.bf16.mxu0 0
    %751 = vmatmul.mubr.bf16.gmra.mxu0 %v326
    %v752 = vpop.f32.mrf.mxu0
    %v753 = vadd.f32 %v95, %v752
    %v754 = vpop.f32.mrf.mxu0
    %v755 = vadd.f32 %v99, %v754
    %v756 = vpop.f32.mrf.mxu0
    %v757 = vadd.f32 %v95, %v756
    %v758 = vpop.f32.mrf.mxu0
    %v759 = vadd.f32 %v99, %v758
    %760 = vmatprep.mubr.bf16.mxu0 0
    %761 = vmatmul.mubr.bf16.gmra.mxu0 %v329
    %v762 = vpop.f32.mrf.mxu0
    %v763 = vadd.f32 %v95, %v762
    %v764 = vpop.f32.mrf.mxu0
    %v765 = vadd.f32 %v99, %v764
    %v766 = vpop.f32.mrf.mxu0
    %v767 = vadd.f32 %v95, %v766
    %v768 = vpop.f32.mrf.mxu0
    %v769 = vadd.f32 %v99, %v768
    %770 = vmatprep.mubr.bf16.mxu0 0
    %771 = vmatmul.mubr.bf16.gmra.mxu0 %v332
    %v772 = vpop.f32.mrf.mxu0
    %v773 = vadd.f32 %v95, %v772
    %v774 = vpop.f32.mrf.mxu0
    %v775 = vadd.f32 %v99, %v774
    %v776 = vpop.f32.mrf.mxu0
    %v777 = vadd.f32 %v95, %v776
    %v778 = vpop.f32.mrf.mxu0
    %v779 = vadd.f32 %v99, %v778
    %780 = vmatprep.mubr.bf16.mxu0 0
    %781 = vmatmul.mubr.bf16.gmra.mxu0 %v335
    %v782 = vpop.f32.mrf.mxu0
    %v783 = vadd.f32 %v95, %v782
    %v784 = vpop.f32.mrf.mxu0
    %v785 = vadd.f32 %v99, %v784
    %v786 = vpop.f32.mrf.mxu0
    %v787 = vadd.f32 %v95, %v786
    %v788 = vpop.f32.mrf.mxu0
    %v789 = vadd.f32 %v99, %v788
    %790 = vmatprep.mubr.bf16.mxu0 0
    %791 = vmatmul.mubr.bf16.gmra.mxu0 %v338
    %v792 = vpop.f32.mrf.mxu0
    %v793 = vadd.f32 %v95, %v792
    %v794 = vpop.f32.mrf.mxu0
    %v795 = vadd.f32 %v99, %v794
    %v796 = vpop.f32.mrf.mxu0
    %v797 = vadd.f32 %v95, %v796
    %v798 = vpop.f32.mrf.mxu0
    %v799 = vadd.f32 %v99, %v798
    %800 = vmatprep.mubr.bf16.mxu0 0
    %801 = vmatmul.mubr.bf16.gmra.mxu0 %v341
    %v802 = vpop.f32.mrf.mxu0
    %v803 = vadd.f32 %v95, %v802
    %v804 = vpop.f32.mrf.mxu0
    %v805 = vadd.f32 %v99, %v804
    %v806 = vpop.f32.mrf.mxu0
    %v807 = vadd.f32 %v95, %v806
    %v808 = vpop.f32.mrf.mxu0
    %v809 = vadd.f32 %v99, %v808
    %810 = vmatprep.mubr.bf16.mxu0 0
    %811 = vmatmul.mubr.bf16.gmra.mxu0 %v344
    %v812 = vpop.f32.mrf.mxu0
    %v813 = vadd.f32 %v95, %v812
    %v814 = vpop.f32.mrf.mxu0
    %v815 = vadd.f32 %v99, %v814
    %v816 = vpop.f32.mrf.mxu0
    %v817 = vadd.f32 %v95, %v816
    %v818 = vpop.f32.mrf.mxu0
    %v819 = vadd.f32 %v99, %v818
    %820 = vmatprep.mubr.bf16.mxu0 0
    %821 = vmatmul.mubr.bf16.gmra.mxu0 %v347
    %v822 = vpop.f32.mrf.mxu0
    %v823 = vadd.f32 %v95, %v822
    %v824 = vpop.f32.mrf.mxu0
    %v825 = vadd.f32 %v99, %v824
    %v826 = vpop.f32.mrf.mxu0
    %v827 = vadd.f32 %v95, %v826
    %v828 = vpop.f32.mrf.mxu0
    %v829 = vadd.f32 %v99, %v828
    %830 = vmatprep.mubr.bf16.mxu0 0
    %831 = vmatmul.mubr.bf16.gmra.mxu0 %v350
    %v832 = vpop.f32.mrf.mxu0
    %v833 = vadd.f32 %v95, %v832
    %v834 = vpop.f32.mrf.mxu0
    %v835 = vadd.f32 %v99, %v834
    %v836 = vpop.f32.mrf.mxu0
    %v837 = vadd.f32 %v95, %v836
    %v838 = vpop.f32.mrf.mxu0
    %v839 = vadd.f32 %v99, %v838
    %840 = vmatprep.mubr.bf16.mxu0 0
    %841 = vmatmul.mubr.bf16.gmra.mxu0 %v353
    %v842 = vpop.f32.mrf.mxu0
    %v843 = vadd.f32 %v95, %v842
    %v844 = vpop.f32.mrf.mxu0
    %v845 = vadd.f32 %v99, %v844
    %v846 = vpop.f32.mrf.mxu0
    %v847 = vadd.f32 %v95, %v846
    %v848 = vpop.f32.mrf.mxu0
    %v849 = vadd.f32 %v99, %v848
    %850 = vmatprep.mubr.bf16.mxu0 0
    %851 = vmatmul.mubr.bf16.gmra.mxu0 %v356
    %v852 = vpop.f32.mrf.mxu0
    %v853 = vadd.f32 %v95, %v852
    %v854 = vpop.f32.mrf.mxu0
    %v855 = vadd.f32 %v99, %v854
    %v856 = vpop.f32.mrf.mxu0
    %v857 = vadd.f32 %v95, %v856
    %v858 = vpop.f32.mrf.mxu0
    %v859 = vadd.f32 %v99, %v858
    %860 = vmatprep.mubr.bf16.mxu0 0
    %861 = vmatmul.mubr.bf16.gmra.mxu0 %v359
    %v862 = vpop.f32.mrf.mxu0
    %v863 = vadd.f32 %v95, %v862
    %v864 = vpop.f32.mrf.mxu0
    %v865 = vadd.f32 %v99, %v864
    %v866 = vpop.f32.mrf.mxu0
    %v867 = vadd.f32 %v95, %v866
    %v868 = vpop.f32.mrf.mxu0
    %v869 = vadd.f32 %v99, %v868
    %870 = vmatprep.mubr.bf16.mxu0 0
    %871 = vmatmul.mubr.bf16.gmra.mxu0 %v362
    %v872 = vpop.f32.mrf.mxu0
    %v873 = vadd.f32 %v95, %v872
    %v874 = vpop.f32.mrf.mxu0
    %v875 = vadd.f32 %v99, %v874
    %v876 = vpop.f32.mrf.mxu0
    %v877 = vadd.f32 %v95, %v876
    %v878 = vpop.f32.mrf.mxu0
    %v879 = vadd.f32 %v99, %v878
    %880 = vmatprep.mubr.bf16.mxu0 0
    %881 = vmatmul.mubr.bf16.gmra.mxu0 %v365
    %v882 = vpop.f32.mrf.mxu0
    %v883 = vadd.f32 %v95, %v882
    %v884 = vpop.f32.mrf.mxu0
    %v885 = vadd.f32 %v99, %v884
    %v886 = vpop.f32.mrf.mxu0
    %v887 = vadd.f32 %v95, %v886
    %v888 = vpop.f32.mrf.mxu0
    %v889 = vadd.f32 %v99, %v888
    %890 = vmatprep.mubr.bf16.mxu0 0
    %891 = vmatmul.mubr.bf16.gmra.mxu0 %v368
    %v892 = vpop.f32.mrf.mxu0
    %v893 = vadd.f32 %v95, %v892
    %v894 = vpop.f32.mrf.mxu0
    %v895 = vadd.f32 %v99, %v894
    %v896 = vpop.f32.mrf.mxu0
    %v897 = vadd.f32 %v95, %v896
    %v898 = vpop.f32.mrf.mxu0
    %v899 = vadd.f32 %v99, %v898
    %900 = vmatprep.mubr.bf16.mxu0 0
    %901 = vmatmul.mubr.bf16.gmra.mxu0 %v371
    %v902 = vpop.f32.mrf.mxu0
    %v903 = vadd.f32 %v95, %v902
    %v904 = vpop.f32.mrf.mxu0
    %v905 = vadd.f32 %v99, %v904
    %v906 = vpop.f32.mrf.mxu0
    %v907 = vadd.f32 %v95, %v906
    %v908 = vpop.f32.mrf.mxu0
    %v909 = vadd.f32 %v99, %v908
    %910 = vmatprep.mubr.bf16.mxu0 0
    %911 = vmatmul.mubr.bf16.gmra.mxu0 %v374
    %v912 = vpop.f32.mrf.mxu0
    %v913 = vadd.f32 %v95, %v912
    %v914 = vpop.f32.mrf.mxu0
    %v915 = vadd.f32 %v99, %v914
    %v916 = vpop.f32.mrf.mxu0
    %v917 = vadd.f32 %v95, %v916
    %v918 = vpop.f32.mrf.mxu0
    %v919 = vadd.f32 %v99, %v918
    %920 = vmatprep.mubr.bf16.mxu0 0
    %921 = vmatmul.mubr.bf16.gmra.mxu0 %v377
    %v922 = vpop.f32.mrf.mxu0
    %v923 = vadd.f32 %v95, %v922
    %v924 = vpop.f32.mrf.mxu0
    %v925 = vadd.f32 %v99, %v924
    %v926 = vpop.f32.mrf.mxu0
    %v927 = vadd.f32 %v95, %v926
    %v928 = vpop.f32.mrf.mxu0
    %v929 = vadd.f32 %v99, %v928
    %930 = vmatprep.mubr.bf16.mxu0 0
    %931 = vmatmul.mubr.bf16.gmra.mxu0 %v380
    %v932 = vpop.f32.mrf.mxu0
    %v933 = vadd.f32 %v95, %v932
    %v934 = vpop.f32.mrf.mxu0
    %v935 = vadd.f32 %v99, %v934
    %v936 = vpop.f32.mrf.mxu0
    %v937 = vadd.f32 %v95, %v936
    %v938 = vpop.f32.mrf.mxu0
    %v939 = vadd.f32 %v99, %v938
    %940 = vmatprep.mubr.bf16.mxu0 0
    %941 = vmatmul.mubr.bf16.gmra.mxu0 %v383
    %v942 = vpop.f32.mrf.mxu0
    %v943 = vadd.f32 %v95, %v942
    %v944 = vpop.f32.mrf.mxu0
    %v945 = vadd.f32 %v99, %v944
    %v946 = vpop.f32.mrf.mxu0
    %v947 = vadd.f32 %v95, %v946
    %v948 = vpop.f32.mrf.mxu0
    %v949 = vadd.f32 %v99, %v948
    %950 = vdwg.mxu0
    %v951 = vmul.f32 %v703, 0.5
    %v952 = vmul.f32 %v705, 0.5
    %v953 = vmul.f32 %v707, 0.5
    %v954 = vmul.f32 %v709, 0.5
    %v955 = vmul.f32 %v713, 0.5
    %v956 = vmul.f32 %v715, 0.5
    %v957 = vmul.f32 %v717, 0.5
    %v958 = vmul.f32 %v719, 0.5
    %v959 = vmul.f32 %v723, 0.5
    %v960 = vmul.f32 %v725, 0.5
    %v961 = vmul.f32 %v727, 0.5
    %v962 = vmul.f32 %v729, 0.5
    %v963 = vmul.f32 %v733, 0.5
    %v964 = vmul.f32 %v735, 0.5
    %v965 = vmul.f32 %v737, 0.5
    %v966 = vmul.f32 %v739, 0.5
    %v967 = vmul.f32 %v743, 0.5
    %v968 = vmul.f32 %v745, 0.5
    %v969 = vmul.f32 %v747, 0.5
    %v970 = vmul.f32 %v749, 0.5
    %v971 = vmul.f32 %v753, 0.5
    %v972 = vmul.f32 %v755, 0.5
    %v973 = vmul.f32 %v757, 0.5
    %v974 = vmul.f32 %v759, 0.5
    %v975 = vmul.f32 %v763, 0.5
    %v976 = vmul.f32 %v765, 0.5
    %v977 = vmul.f32 %v767, 0.5
    %v978 = vmul.f32 %v769, 0.5
    %v979 = vmul.f32 %v773, 0.5
    %v980 = vmul.f32 %v775, 0.5
    %v981 = vmul.f32 %v777, 0.5
    %v982 = vmul.f32 %v779, 0.5
    %v983 = vmul.f32 %v783, 0.5
    %v984 = vmul.f32 %v785, 0.5
    %v985 = vmul.f32 %v787, 0.5
    %v986 = vmul.f32 %v789, 0.5
    %v987 = vmul.f32 %v793, 0.5
    %v988 = vmul.f32 %v795, 0.5
    %v989 = vmul.f32 %v797, 0.5
    %v990 = vmul.f32 %v799, 0.5
    %v991 = vmul.f32 %v803, 0.5
    %v992 = vmul.f32 %v805, 0.5
    %v993 = vmul.f32 %v807, 0.5
    %v994 = vmul.f32 %v809, 0.5
    %v995 = vmul.f32 %v813, 0.5
    %v996 = vmul.f32 %v815, 0.5
    %v997 = vmul.f32 %v817, 0.5
    %v998 = vmul.f32 %v819, 0.5
    %v999 = vmul.f32 %v823, 0.5
    %v1000 = vmul.f32 %v825, 0.5
    %v1001 = vmul.f32 %v827, 0.5
    %v1002 = vmul.f32 %v829, 0.5
    %v1003 = vmul.f32 %v833, 0.5
    %v1004 = vmul.f32 %v835, 0.5
    %v1005 = vmul.f32 %v837, 0.5
    %v1006 = vmul.f32 %v839, 0.5
    %v1007 = vmul.f32 %v843, 0.5
    %v1008 = vmul.f32 %v845, 0.5
    %v1009 = vmul.f32 %v847, 0.5
    %v1010 = vmul.f32 %v849, 0.5
    %v1011 = vmul.f32 %v853, 0.5
    %v1012 = vmul.f32 %v855, 0.5
    %v1013 = vmul.f32 %v857, 0.5
    %v1014 = vmul.f32 %v859, 0.5
    %v1015 = vmul.f32 %v863, 0.5
    %v1016 = vmul.f32 %v865, 0.5
    %v1017 = vmul.f32 %v867, 0.5
    %v1018 = vmul.f32 %v869, 0.5
    %v1019 = vmul.f32 %v873, 0.5
    %v1020 = vmul.f32 %v875, 0.5
    %v1021 = vmul.f32 %v877, 0.5
    %v1022 = vmul.f32 %v879, 0.5
    %v1023 = vmul.f32 %v883, 0.5
    %v1024 = vmul.f32 %v885, 0.5
    %v1025 = vmul.f32 %v887, 0.5
    %v1026 = vmul.f32 %v889, 0.5
    %v1027 = vmul.f32 %v893, 0.5
    %v1028 = vmul.f32 %v895, 0.5
    %v1029 = vmul.f32 %v897, 0.5
    %v1030 = vmul.f32 %v899, 0.5
    %v1031 = vmul.f32 %v903, 0.5
    %v1032 = vmul.f32 %v905, 0.5
    %v1033 = vmul.f32 %v907, 0.5
    %v1034 = vmul.f32 %v909, 0.5
    %v1035 = vmul.f32 %v913, 0.5
    %v1036 = vmul.f32 %v915, 0.5
    %v1037 = vmul.f32 %v917, 0.5
    %v1038 = vmul.f32 %v919, 0.5
    %v1039 = vmul.f32 %v923, 0.5
    %v1040 = vmul.f32 %v925, 0.5
    %v1041 = vmul.f32 %v927, 0.5
    %v1042 = vmul.f32 %v929, 0.5
    %v1043 = vmul.f32 %v933, 0.5
    %v1044 = vmul.f32 %v935, 0.5
    %v1045 = vmul.f32 %v937, 0.5
    %v1046 = vmul.f32 %v939, 0.5
    %v1047 = vmul.f32 %v943, 0.5
    %v1048 = vmul.f32 %v945, 0.5
    %v1049 = vmul.f32 %v947, 0.5
    %v1050 = vmul.f32 %v949, 0.5
    %v1051 = vmul.f32 %v703, 0.70710677
    %v1052 = vmul.f32 %v705, 0.70710677
    %v1053 = vmul.f32 %v707, 0.70710677
    %v1054 = vmul.f32 %v709, 0.70710677
    %v1055 = vmul.f32 %v713, 0.70710677
    %v1056 = vmul.f32 %v715, 0.70710677
    %v1057 = vmul.f32 %v717, 0.70710677
    %v1058 = vmul.f32 %v719, 0.70710677
    %v1059 = vmul.f32 %v723, 0.70710677
    %v1060 = vmul.f32 %v725, 0.70710677
    %v1061 = vmul.f32 %v727, 0.70710677
    %v1062 = vmul.f32 %v729, 0.70710677
    %v1063 = vmul.f32 %v733, 0.70710677
    %v1064 = vmul.f32 %v735, 0.70710677
    %v1065 = vmul.f32 %v737, 0.70710677
    %v1066 = vmul.f32 %v739, 0.70710677
    %v1067 = vmul.f32 %v743, 0.70710677
    %v1068 = vmul.f32 %v745, 0.70710677
    %v1069 = vmul.f32 %v747, 0.70710677
    %v1070 = vmul.f32 %v749, 0.70710677
    %v1071 = vmul.f32 %v753, 0.70710677
    %v1072 = vmul.f32 %v755, 0.70710677
    %v1073 = vmul.f32 %v757, 0.70710677
    %v1074 = vmul.f32 %v759, 0.70710677
    %v1075 = vmul.f32 %v763, 0.70710677
    %v1076 = vmul.f32 %v765, 0.70710677
    %v1077 = vmul.f32 %v767, 0.70710677
    %v1078 = vmul.f32 %v769, 0.70710677
    %v1079 = vmul.f32 %v773, 0.70710677
    %v1080 = vmul.f32 %v775, 0.70710677
    %v1081 = vmul.f32 %v777, 0.70710677
    %v1082 = vmul.f32 %v779, 0.70710677
    %v1083 = vmul.f32 %v783, 0.70710677
    %v1084 = vmul.f32 %v785, 0.70710677
    %v1085 = vmul.f32 %v787, 0.70710677
    %v1086 = vmul.f32 %v789, 0.70710677
    %v1087 = vmul.f32 %v793, 0.70710677
    %v1088 = vmul.f32 %v795, 0.70710677
    %v1089 = vmul.f32 %v797, 0.70710677
    %v1090 = vmul.f32 %v799, 0.70710677
    %v1091 = vmul.f32 %v803, 0.70710677
    %v1092 = vmul.f32 %v805, 0.70710677
    %v1093 = vmul.f32 %v807, 0.70710677
    %v1094 = vmul.f32 %v809, 0.70710677
    %v1095 = vmul.f32 %v813, 0.70710677
    %v1096 = vmul.f32 %v815, 0.70710677
    %v1097 = vmul.f32 %v817, 0.70710677
    %v1098 = vmul.f32 %v819, 0.70710677
    %v1099 = vmul.f32 %v823, 0.70710677
    %v1100 = vmul.f32 %v825, 0.70710677
    %v1101 = vmul.f32 %v827, 0.70710677
    %v1102 = vmul.f32 %v829, 0.70710677
    %v1103 = vmul.f32 %v833, 0.70710677
    %v1104 = vmul.f32 %v835, 0.70710677
    %v1105 = vmul.f32 %v837, 0.70710677
    %v1106 = vmul.f32 %v839, 0.70710677
    %v1107 = vmul.f32 %v843, 0.70710677
    %v1108 = vmul.f32 %v845, 0.70710677
    %v1109 = vmul.f32 %v847, 0.70710677
    %v1110 = vmul.f32 %v849, 0.70710677
    %v1111 = vmul.f32 %v853, 0.70710677
    %v1112 = vmul.f32 %v855, 0.70710677
    %v1113 = vmul.f32 %v857, 0.70710677
    %v1114 = vmul.f32 %v859, 0.70710677
    %v1115 = vmul.f32 %v863, 0.70710677
    %v1116 = vmul.f32 %v865, 0.70710677
    %v1117 = vmul.f32 %v867, 0.70710677
    %v1118 = vmul.f32 %v869, 0.70710677
    %v1119 = vmul.f32 %v873, 0.70710677
    %v1120 = vmul.f32 %v875, 0.70710677
    %v1121 = vmul.f32 %v877, 0.70710677
    %v1122 = vmul.f32 %v879, 0.70710677
    %v1123 = vmul.f32 %v883, 0.70710677
    %v1124 = vmul.f32 %v885, 0.70710677
    %v1125 = vmul.f32 %v887, 0.70710677
    %v1126 = vmul.f32 %v889, 0.70710677
    %v1127 = vmul.f32 %v893, 0.70710677
    %v1128 = vmul.f32 %v895, 0.70710677
    %v1129 = vmul.f32 %v897, 0.70710677
    %v1130 = vmul.f32 %v899, 0.70710677
    %v1131 = vmul.f32 %v903, 0.70710677
    %v1132 = vmul.f32 %v905, 0.70710677
    %v1133 = vmul.f32 %v907, 0.70710677
    %v1134 = vmul.f32 %v909, 0.70710677
    %v1135 = vmul.f32 %v913, 0.70710677
    %v1136 = vmul.f32 %v915, 0.70710677
    %v1137 = vmul.f32 %v917, 0.70710677
    %v1138 = vmul.f32 %v919, 0.70710677
    %v1139 = vmul.f32 %v923, 0.70710677
    %v1140 = vmul.f32 %v925, 0.70710677
    %v1141 = vmul.f32 %v927, 0.70710677
    %v1142 = vmul.f32 %v929, 0.70710677
    %v1143 = vmul.f32 %v933, 0.70710677
    %v1144 = vmul.f32 %v935, 0.70710677
    %v1145 = vmul.f32 %v937, 0.70710677
    %v1146 = vmul.f32 %v939, 0.70710677
    %v1147 = vmul.f32 %v943, 0.70710677
    %v1148 = vmul.f32 %v945, 0.70710677
    %v1149 = vmul.f32 %v947, 0.70710677
    %v1150 = vmul.f32 %v949, 0.70710677
    %v1151 = verf.f32.pop %v1051
    %v1152 = verf.f32.pop %v1052
    %v1153 = verf.f32.pop %v1053
    %v1154 = verf.f32.pop %v1054
    %v1155 = verf.f32.pop %v1055
    %v1156 = verf.f32.pop %v1056
    %v1157 = verf.f32.pop %v1057
    %v1158 = verf.f32.pop %v1058
    %v1159 = verf.f32.pop %v1059
    %v1160 = verf.f32.pop %v1060
    %v1161 = verf.f32.pop %v1061
    %v1162 = verf.f32.pop %v1062
    %v1163 = verf.f32.pop %v1063
    %v1164 = verf.f32.pop %v1064
    %v1165 = verf.f32.pop %v1065
    %v1166 = verf.f32.pop %v1066
    %v1167 = verf.f32.pop %v1067
    %v1168 = verf.f32.pop %v1068
    %v1169 = verf.f32.pop %v1069
    %v1170 = verf.f32.pop %v1070
    %v1171 = verf.f32.pop %v1071
    %v1172 = verf.f32.pop %v1072
    %v1173 = verf.f32.pop %v1073
    %v1174 = verf.f32.pop %v1074
    %v1175 = verf.f32.pop %v1075
    %v1176 = verf.f32.pop %v1076
    %v1177 = verf.f32.pop %v1077
    %v1178 = verf.f32.pop %v1078
    %v1179 = verf.f32.pop %v1079
    %v1180 = verf.f32.pop %v1080
    %v1181 = verf.f32.pop %v1081
    %v1182 = verf.f32.pop %v1082
    %v1183 = verf.f32.pop %v1083
    %v1184 = verf.f32.pop %v1084
    %v1185 = verf.f32.pop %v1085
    %v1186 = verf.f32.pop %v1086
    %v1187 = verf.f32.pop %v1087
    %v1188 = verf.f32.pop %v1088
    %v1189 = verf.f32.pop %v1089
    %v1190 = verf.f32.pop %v1090
    %v1191 = verf.f32.pop %v1091
    %v1192 = verf.f32.pop %v1092
    %v1193 = verf.f32.pop %v1093
    %v1194 = verf.f32.pop %v1094
    %v1195 = verf.f32.pop %v1095
    %v1196 = verf.f32.pop %v1096
    %v1197 = verf.f32.pop %v1097
    %v1198 = verf.f32.pop %v1098
    %v1199 = verf.f32.pop %v1099
    %v1200 = verf.f32.pop %v1100
    %v1201 = verf.f32.pop %v1101
    %v1202 = verf.f32.pop %v1102
    %v1203 = verf.f32.pop %v1103
    %v1204 = verf.f32.pop %v1104
    %v1205 = verf.f32.pop %v1105
    %v1206 = verf.f32.pop %v1106
    %v1207 = verf.f32.pop %v1107
    %v1208 = verf.f32.pop %v1108
    %v1209 = verf.f32.pop %v1109
    %v1210 = verf.f32.pop %v1110
    %v1211 = verf.f32.pop %v1111
    %v1212 = verf.f32.pop %v1112
    %v1213 = verf.f32.pop %v1113
    %v1214 = verf.f32.pop %v1114
    %v1215 = verf.f32.pop %v1115
    %v1216 = verf.f32.pop %v1116
    %v1217 = verf.f32.pop %v1117
    %v1218 = verf.f32.pop %v1118
    %v1219 = verf.f32.pop %v1119
    %v1220 = verf.f32.pop %v1120
    %v1221 = verf.f32.pop %v1121
    %v1222 = verf.f32.pop %v1122
    %v1223 = verf.f32.pop %v1123
    %v1224 = verf.f32.pop %v1124
    %v1225 = verf.f32.pop %v1125
    %v1226 = verf.f32.pop %v1126
    %v1227 = verf.f32.pop %v1127
    %v1228 = verf.f32.pop %v1128
    %v1229 = verf.f32.pop %v1129
    %v1230 = verf.f32.pop %v1130
    %v1231 = verf.f32.pop %v1131
    %v1232 = verf.f32.pop %v1132
    %v1233 = verf.f32.pop %v1133
    %v1234 = verf.f32.pop %v1134
    %v1235 = verf.f32.pop %v1135
    %v1236 = verf.f32.pop %v1136
    %v1237 = verf.f32.pop %v1137
    %v1238 = verf.f32.pop %v1138
    %v1239 = verf.f32.pop %v1139
    %v1240 = verf.f32.pop %v1140
    %v1241 = verf.f32.pop %v1141
    %v1242 = verf.f32.pop %v1142
    %v1243 = verf.f32.pop %v1143
    %v1244 = verf.f32.pop %v1144
    %v1245 = verf.f32.pop %v1145
    %v1246 = verf.f32.pop %v1146
    %v1247 = verf.f32.pop %v1147
    %v1248 = verf.f32.pop %v1148
    %v1249 = verf.f32.pop %v1149
    %v1250 = verf.f32.pop %v1150
    %v1251 = vadd.f32 %v1151, 1.0
    %v1252 = vadd.f32 %v1152, 1.0
    %v1253 = vadd.f32 %v1153, 1.0
    %v1254 = vadd.f32 %v1154, 1.0
    %v1255 = vadd.f32 %v1155, 1.0
    %v1256 = vadd.f32 %v1156, 1.0
    %v1257 = vadd.f32 %v1157, 1.0
    %v1258 = vadd.f32 %v1158, 1.0
    %v1259 = vadd.f32 %v1159, 1.0
    %v1260 = vadd.f32 %v1160, 1.0
    %v1261 = vadd.f32 %v1161, 1.0
    %v1262 = vadd.f32 %v1162, 1.0
    %v1263 = vadd.f32 %v1163, 1.0
    %v1264 = vadd.f32 %v1164, 1.0
    %v1265 = vadd.f32 %v1165, 1.0
    %v1266 = vadd.f32 %v1166, 1.0
    %v1267 = vadd.f32 %v1167, 1.0
    %v1268 = vadd.f32 %v1168, 1.0
    %v1269 = vadd.f32 %v1169, 1.0
    %v1270 = vadd.f32 %v1170, 1.0
    %v1271 = vadd.f32 %v1171, 1.0
    %v1272 = vadd.f32 %v1172, 1.0
    %v1273 = vadd.f32 %v1173, 1.0
    %v1274 = vadd.f32 %v1174, 1.0
    %v1275 = vadd.f32 %v1175, 1.0
    %v1276 = vadd.f32 %v1176, 1.0
    %v1277 = vadd.f32 %v1177, 1.0
    %v1278 = vadd.f32 %v1178, 1.0
    %v1279 = vadd.f32 %v1179, 1.0
    %v1280 = vadd.f32 %v1180, 1.0
    %v1281 = vadd.f32 %v1181, 1.0
    %v1282 = vadd.f32 %v1182, 1.0
    %v1283 = vadd.f32 %v1183, 1.0
    %v1284 = vadd.f32 %v1184, 1.0
    %v1285 = vadd.f32 %v1185, 1.0
    %v1286 = vadd.f32 %v1186, 1.0
    %v1287 = vadd.f32 %v1187, 1.0
    %v1288 = vadd.f32 %v1188, 1.0
    %v1289 = vadd.f32 %v1189, 1.0
    %v1290 = vadd.f32 %v1190, 1.0
    %v1291 = vadd.f32 %v1191, 1.0
    %v1292 = vadd.f32 %v1192, 1.0
    %v1293 = vadd.f32 %v1193, 1.0
    %v1294 = vadd.f32 %v1194, 1.0
    %v1295 = vadd.f32 %v1195, 1.0
    %v1296 = vadd.f32 %v1196, 1.0
    %v1297 = vadd.f32 %v1197, 1.0
    %v1298 = vadd.f32 %v1198, 1.0
    %v1299 = vadd.f32 %v1199, 1.0
    %v1300 = vadd.f32 %v1200, 1.0
    %v1301 = vadd.f32 %v1201, 1.0
    %v1302 = vadd.f32 %v1202, 1.0
    %v1303 = vadd.f32 %v1203, 1.0
    %v1304 = vadd.f32 %v1204, 1.0
    %v1305 = vadd.f32 %v1205, 1.0
    %v1306 = vadd.f32 %v1206, 1.0
    %v1307 = vadd.f32 %v1207, 1.0
    %v1308 = vadd.f32 %v1208, 1.0
    %v1309 = vadd.f32 %v1209, 1.0
    %v1310 = vadd.f32 %v1210, 1.0
    %v1311 = vadd.f32 %v1211, 1.0
    %v1312 = vadd.f32 %v1212, 1.0
    %v1313 = vadd.f32 %v1213, 1.0
    %v1314 = vadd.f32 %v1214, 1.0
    %v1315 = vadd.f32 %v1215, 1.0
    %v1316 = vadd.f32 %v1216, 1.0
    %v1317 = vadd.f32 %v1217, 1.0
    %v1318 = vadd.f32 %v1218, 1.0
    %v1319 = vadd.f32 %v1219, 1.0
    %v1320 = vadd.f32 %v1220, 1.0
    %v1321 = vadd.f32 %v1221, 1.0
    %v1322 = vadd.f32 %v1222, 1.0
    %v1323 = vadd.f32 %v1223, 1.0
    %v1324 = vadd.f32 %v1224, 1.0
    %v1325 = vadd.f32 %v1225, 1.0
    %v1326 = vadd.f32 %v1226, 1.0
    %v1327 = vadd.f32 %v1227, 1.0
    %v1328 = vadd.f32 %v1228, 1.0
    %v1329 = vadd.f32 %v1229, 1.0
    %v1330 = vadd.f32 %v1230, 1.0
    %v1331 = vadd.f32 %v1231, 1.0
    %v1332 = vadd.f32 %v1232, 1.0
    %v1333 = vadd.f32 %v1233, 1.0
    %v1334 = vadd.f32 %v1234, 1.0
    %v1335 = vadd.f32 %v1235, 1.0
    %v1336 = vadd.f32 %v1236, 1.0
    %v1337 = vadd.f32 %v1237, 1.0
    %v1338 = vadd.f32 %v1238, 1.0
    %v1339 = vadd.f32 %v1239, 1.0
    %v1340 = vadd.f32 %v1240, 1.0
    %v1341 = vadd.f32 %v1241, 1.0
    %v1342 = vadd.f32 %v1242, 1.0
    %v1343 = vadd.f32 %v1243, 1.0
    %v1344 = vadd.f32 %v1244, 1.0
    %v1345 = vadd.f32 %v1245, 1.0
    %v1346 = vadd.f32 %v1246, 1.0
    %v1347 = vadd.f32 %v1247, 1.0
    %v1348 = vadd.f32 %v1248, 1.0
    %v1349 = vadd.f32 %v1249, 1.0
    %v1350 = vadd.f32 %v1250, 1.0
    %v1351 = vmul.f32 %v951, %v1251
    %v1352 = vmul.f32 %v952, %v1252
    %v1353 = vmul.f32 %v953, %v1253
    %v1354 = vmul.f32 %v954, %v1254
    %v1355 = vmul.f32 %v955, %v1255
    %v1356 = vmul.f32 %v956, %v1256
    %v1357 = vmul.f32 %v957, %v1257
    %v1358 = vmul.f32 %v958, %v1258
    %v1359 = vmul.f32 %v959, %v1259
    %v1360 = vmul.f32 %v960, %v1260
    %v1361 = vmul.f32 %v961, %v1261
    %v1362 = vmul.f32 %v962, %v1262
    %v1363 = vmul.f32 %v963, %v1263
    %v1364 = vmul.f32 %v964, %v1264
    %v1365 = vmul.f32 %v965, %v1265
    %v1366 = vmul.f32 %v966, %v1266
    %v1367 = vmul.f32 %v967, %v1267
    %v1368 = vmul.f32 %v968, %v1268
    %v1369 = vmul.f32 %v969, %v1269
    %v1370 = vmul.f32 %v970, %v1270
    %v1371 = vmul.f32 %v971, %v1271
    %v1372 = vmul.f32 %v972, %v1272
    %v1373 = vmul.f32 %v973, %v1273
    %v1374 = vmul.f32 %v974, %v1274
    %v1375 = vmul.f32 %v975, %v1275
    %v1376 = vmul.f32 %v976, %v1276
    %v1377 = vmul.f32 %v977, %v1277
    %v1378 = vmul.f32 %v978, %v1278
    %v1379 = vmul.f32 %v979, %v1279
    %v1380 = vmul.f32 %v980, %v1280
    %v1381 = vmul.f32 %v981, %v1281
    %v1382 = vmul.f32 %v982, %v1282
    %v1383 = vmul.f32 %v983, %v1283
    %v1384 = vmul.f32 %v984, %v1284
    %v1385 = vmul.f32 %v985, %v1285
    %v1386 = vmul.f32 %v986, %v1286
    %v1387 = vmul.f32 %v987, %v1287
    %v1388 = vmul.f32 %v988, %v1288
    %v1389 = vmul.f32 %v989, %v1289
    %v1390 = vmul.f32 %v990, %v1290
    %v1391 = vmul.f32 %v991, %v1291
    %v1392 = vmul.f32 %v992, %v1292
    %v1393 = vmul.f32 %v993, %v1293
    %v1394 = vmul.f32 %v994, %v1294
    %v1395 = vmul.f32 %v995, %v1295
    %v1396 = vmul.f32 %v996, %v1296
    %v1397 = vmul.f32 %v997, %v1297
    %v1398 = vmul.f32 %v998, %v1298
    %v1399 = vmul.f32 %v999, %v1299
    %v1400 = vmul.f32 %v1000, %v1300
    %v1401 = vmul.f32 %v1001, %v1301
    %v1402 = vmul.f32 %v1002, %v1302
    %v1403 = vmul.f32 %v1003, %v1303
    %v1404 = vmul.f32 %v1004, %v1304
    %v1405 = vmul.f32 %v1005, %v1305
    %v1406 = vmul.f32 %v1006, %v1306
    %v1407 = vmul.f32 %v1007, %v1307
    %v1408 = vmul.f32 %v1008, %v1308
    %v1409 = vmul.f32 %v1009, %v1309
    %v1410 = vmul.f32 %v1010, %v1310
    %v1411 = vmul.f32 %v1011, %v1311
    %v1412 = vmul.f32 %v1012, %v1312
    %v1413 = vmul.f32 %v1013, %v1313
    %v1414 = vmul.f32 %v1014, %v1314
    %v1415 = vmul.f32 %v1015, %v1315
    %v1416 = vmul.f32 %v1016, %v1316
    %v1417 = vmul.f32 %v1017, %v1317
    %v1418 = vmul.f32 %v1018, %v1318
    %v1419 = vmul.f32 %v1019, %v1319
    %v1420 = vmul.f32 %v1020, %v1320
    %v1421 = vmul.f32 %v1021, %v1321
    %v1422 = vmul.f32 %v1022, %v1322
    %v1423 = vmul.f32 %v1023, %v1323
    %v1424 = vmul.f32 %v1024, %v1324
    %v1425 = vmul.f32 %v1025, %v1325
    %v1426 = vmul.f32 %v1026, %v1326
    %v1427 = vmul.f32 %v1027, %v1327
    %v1428 = vmul.f32 %v1028, %v1328
    %v1429 = vmul.f32 %v1029, %v1329
    %v1430 = vmul.f32 %v1030, %v1330
    %v1431 = vmul.f32 %v1031, %v1331
    %v1432 = vmul.f32 %v1032, %v1332
    %v1433 = vmul.f32 %v1033, %v1333
    %v1434 = vmul.f32 %v1034, %v1334
    %v1435 = vmul.f32 %v1035, %v1335
    %v1436 = vmul.f32 %v1036, %v1336
    %v1437 = vmul.f32 %v1037, %v1337
    %v1438 = vmul.f32 %v1038, %v1338
    %v1439 = vmul.f32 %v1039, %v1339
    %v1440 = vmul.f32 %v1040, %v1340
    %v1441 = vmul.f32 %v1041, %v1341
    %v1442 = vmul.f32 %v1042, %v1342
    %v1443 = vmul.f32 %v1043, %v1343
    %v1444 = vmul.f32 %v1044, %v1344
    %v1445 = vmul.f32 %v1045, %v1345
    %v1446 = vmul.f32 %v1046, %v1346
    %v1447 = vmul.f32 %v1047, %v1347
    %v1448 = vmul.f32 %v1048, %v1348
    %v1449 = vmul.f32 %v1049, %v1349
    %v1450 = vmul.f32 %v1050, %v1350
    %v1451 = vmul.f32 %v420, %v1351
    %v1452 = vmul.f32 %v422, %v1352
    %v1453 = vmul.f32 %v424, %v1353
    %v1454 = vmul.f32 %v426, %v1354
    %v1455 = vmul.f32 %v430, %v1355
    %v1456 = vmul.f32 %v432, %v1356
    %v1457 = vmul.f32 %v434, %v1357
    %v1458 = vmul.f32 %v436, %v1358
    %v1459 = vmul.f32 %v440, %v1359
    %v1460 = vmul.f32 %v442, %v1360
    %v1461 = vmul.f32 %v444, %v1361
    %v1462 = vmul.f32 %v446, %v1362
    %v1463 = vmul.f32 %v450, %v1363
    %v1464 = vmul.f32 %v452, %v1364
    %v1465 = vmul.f32 %v454, %v1365
    %v1466 = vmul.f32 %v456, %v1366
    %v1467 = vmul.f32 %v460, %v1367
    %v1468 = vmul.f32 %v462, %v1368
    %v1469 = vmul.f32 %v464, %v1369
    %v1470 = vmul.f32 %v466, %v1370
    %v1471 = vmul.f32 %v470, %v1371
    %v1472 = vmul.f32 %v472, %v1372
    %v1473 = vmul.f32 %v474, %v1373
    %v1474 = vmul.f32 %v476, %v1374
    %v1475 = vmul.f32 %v480, %v1375
    %v1476 = vmul.f32 %v482, %v1376
    %v1477 = vmul.f32 %v484, %v1377
    %v1478 = vmul.f32 %v486, %v1378
    %v1479 = vmul.f32 %v490, %v1379
    %v1480 = vmul.f32 %v492, %v1380
    %v1481 = vmul.f32 %v494, %v1381
    %v1482 = vmul.f32 %v496, %v1382
    %v1483 = vmul.f32 %v500, %v1383
    %v1484 = vmul.f32 %v502, %v1384
    %v1485 = vmul.f32 %v504, %v1385
    %v1486 = vmul.f32 %v506, %v1386
    %v1487 = vmul.f32 %v510, %v1387
    %v1488 = vmul.f32 %v512, %v1388
    %v1489 = vmul.f32 %v514, %v1389
    %v1490 = vmul.f32 %v516, %v1390
    %v1491 = vmul.f32 %v520, %v1391
    %v1492 = vmul.f32 %v522, %v1392
    %v1493 = vmul.f32 %v524, %v1393
    %v1494 = vmul.f32 %v526, %v1394
    %v1495 = vmul.f32 %v530, %v1395
    %v1496 = vmul.f32 %v532, %v1396
    %v1497 = vmul.f32 %v534, %v1397
    %v1498 = vmul.f32 %v536, %v1398
    %v1499 = vmul.f32 %v540, %v1399
    %v1500 = vmul.f32 %v542, %v1400
    %v1501 = vmul.f32 %v544, %v1401
    %v1502 = vmul.f32 %v546, %v1402
    %v1503 = vmul.f32 %v550, %v1403
    %v1504 = vmul.f32 %v552, %v1404
    %v1505 = vmul.f32 %v554, %v1405
    %v1506 = vmul.f32 %v556, %v1406
    %v1507 = vmul.f32 %v560, %v1407
    %v1508 = vmul.f32 %v562, %v1408
    %v1509 = vmul.f32 %v564, %v1409
    %v1510 = vmul.f32 %v566, %v1410
    %v1511 = vmul.f32 %v570, %v1411
    %v1512 = vmul.f32 %v572, %v1412
    %v1513 = vmul.f32 %v574, %v1413
    %v1514 = vmul.f32 %v576, %v1414
    %v1515 = vmul.f32 %v580, %v1415
    %v1516 = vmul.f32 %v582, %v1416
    %v1517 = vmul.f32 %v584, %v1417
    %v1518 = vmul.f32 %v586, %v1418
    %v1519 = vmul.f32 %v590, %v1419
    %v1520 = vmul.f32 %v592, %v1420
    %v1521 = vmul.f32 %v594, %v1421
    %v1522 = vmul.f32 %v596, %v1422
    %v1523 = vmul.f32 %v600, %v1423
    %v1524 = vmul.f32 %v602, %v1424
    %v1525 = vmul.f32 %v604, %v1425
    %v1526 = vmul.f32 %v606, %v1426
    %v1527 = vmul.f32 %v610, %v1427
    %v1528 = vmul.f32 %v612, %v1428
    %v1529 = vmul.f32 %v614, %v1429
    %v1530 = vmul.f32 %v616, %v1430
    %v1531 = vmul.f32 %v620, %v1431
    %v1532 = vmul.f32 %v622, %v1432
    %v1533 = vmul.f32 %v624, %v1433
    %v1534 = vmul.f32 %v626, %v1434
    %v1535 = vmul.f32 %v630, %v1435
    %v1536 = vmul.f32 %v632, %v1436
    %v1537 = vmul.f32 %v634, %v1437
    %v1538 = vmul.f32 %v636, %v1438
    %v1539 = vmul.f32 %v640, %v1439
    %v1540 = vmul.f32 %v642, %v1440
    %v1541 = vmul.f32 %v644, %v1441
    %v1542 = vmul.f32 %v646, %v1442
    %v1543 = vmul.f32 %v650, %v1443
    %v1544 = vmul.f32 %v652, %v1444
    %v1545 = vmul.f32 %v654, %v1445
    %v1546 = vmul.f32 %v656, %v1446
    %v1547 = vmul.f32 %v660, %v1447
    %v1548 = vmul.f32 %v662, %v1448
    %v1549 = vmul.f32 %v664, %v1449
    %v1550 = vmul.f32 %v666, %v1450
    %1551 = vst [vmem:[#allocation2] sm:$0xff] %v1451
    %1552 = vst [vmem:[#allocation2 + $0x8] sm:$0xff] %v1452
    %1553 = vst [vmem:[#allocation2 + $0x10] sm:$0xff] %v1453
    %1554 = vst [vmem:[#allocation2 + $0x18] sm:$0xff] %v1454
    %1555 = vst [vmem:[#allocation2 + $0x20] sm:$0xff] %v1455
    %1556 = vst [vmem:[#allocation2 + $0x28] sm:$0xff] %v1456
    %1557 = vst [vmem:[#allocation2 + $0x30] sm:$0xff] %v1457
    %1558 = vst [vmem:[#allocation2 + $0x38] sm:$0xff] %v1458
    %1559 = vst [vmem:[#allocation2 + $0x40] sm:$0xff] %v1459
    %1560 = vst [vmem:[#allocation2 + $0x48] sm:$0xff] %v1460
    %1561 = vst [vmem:[#allocation2 + $0x50] sm:$0xff] %v1461
    %1562 = vst [vmem:[#allocation2 + $0x58] sm:$0xff] %v1462
    %1563 = vst [vmem:[#allocation2 + $0x60] sm:$0xff] %v1463
    %1564 = vst [vmem:[#allocation2 + $0x68] sm:$0xff] %v1464
    %1565 = vst [vmem:[#allocation2 + $0x70] sm:$0xff] %v1465
    %1566 = vst [vmem:[#allocation2 + $0x78] sm:$0xff] %v1466
    %1567 = vst [vmem:[#allocation2 + $0x80] sm:$0xff] %v1467
    %1568 = vst [vmem:[#allocation2 + $0x88] sm:$0xff] %v1468
    %1569 = vst [vmem:[#allocation2 + $0x90] sm:$0xff] %v1469
    %1570 = vst [vmem:[#allocation2 + $0x98] sm:$0xff] %v1470
    %1571 = vst [vmem:[#allocation2 + $0xa0] sm:$0xff] %v1471
    %1572 = vst [vmem:[#allocation2 + $0xa8] sm:$0xff] %v1472
    %1573 = vst [vmem:[#allocation2 + $0xb0] sm:$0xff] %v1473
    %1574 = vst [vmem:[#allocation2 + $0xb8] sm:$0xff] %v1474
    %1575 = vst [vmem:[#allocation2 + $0xc0] sm:$0xff] %v1475
    %1576 = vst [vmem:[#allocation2 + $0xc8] sm:$0xff] %v1476
    %1577 = vst [vmem:[#allocation2 + $0xd0] sm:$0xff] %v1477
    %1578 = vst [vmem:[#allocation2 + $0xd8] sm:$0xff] %v1478
    %1579 = vst [vmem:[#allocation2 + $0xe0] sm:$0xff] %v1479
    %1580 = vst [vmem:[#allocation2 + $0xe8] sm:$0xff] %v1480
    %1581 = vst [vmem:[#allocation2 + $0xf0] sm:$0xff] %v1481
    %1582 = vst [vmem:[#allocation2 + $0xf8] sm:$0xff] %v1482
    %1583 = vst [vmem:[#allocation2 + $0x100] sm:$0xff] %v1483
    %1584 = vst [vmem:[#allocation2 + $0x108] sm:$0xff] %v1484
    %1585 = vst [vmem:[#allocation2 + $0x110] sm:$0xff] %v1485
    %1586 = vst [vmem:[#allocation2 + $0x118] sm:$0xff] %v1486
    %1587 = vst [vmem:[#allocation2 + $0x120] sm:$0xff] %v1487
    %1588 = vst [vmem:[#allocation2 + $0x128] sm:$0xff] %v1488
    %1589 = vst [vmem:[#allocation2 + $0x130] sm:$0xff] %v1489
    %1590 = vst [vmem:[#allocation2 + $0x138] sm:$0xff] %v1490
    %1591 = vst [vmem:[#allocation2 + $0x140] sm:$0xff] %v1491
    %1592 = vst [vmem:[#allocation2 + $0x148] sm:$0xff] %v1492
    %1593 = vst [vmem:[#allocation2 + $0x150] sm:$0xff] %v1493
    %1594 = vst [vmem:[#allocation2 + $0x158] sm:$0xff] %v1494
    %1595 = vst [vmem:[#allocation2 + $0x160] sm:$0xff] %v1495
    %1596 = vst [vmem:[#allocation2 + $0x168] sm:$0xff] %v1496
    %1597 = vst [vmem:[#allocation2 + $0x170] sm:$0xff] %v1497
    %1598 = vst [vmem:[#allocation2 + $0x178] sm:$0xff] %v1498
    %1599 = vst [vmem:[#allocation2 + $0x180] sm:$0xff] %v1499
    %1600 = vst [vmem:[#allocation2 + $0x188] sm:$0xff] %v1500
    %1601 = vst [vmem:[#allocation2 + $0x190] sm:$0xff] %v1501
    %1602 = vst [vmem:[#allocation2 + $0x198] sm:$0xff] %v1502
    %1603 = vst [vmem:[#allocation2 + $0x1a0] sm:$0xff] %v1503
    %1604 = vst [vmem:[#allocation2 + $0x1a8] sm:$0xff] %v1504
    %1605 = vst [vmem:[#allocation2 + $0x1b0] sm:$0xff] %v1505
    %1606 = vst [vmem:[#allocation2 + $0x1b8] sm:$0xff] %v1506
    %1607 = vst [vmem:[#allocation2 + $0x1c0] sm:$0xff] %v1507
    %1608 = vst [vmem:[#allocation2 + $0x1c8] sm:$0xff] %v1508
    %1609 = vst [vmem:[#allocation2 + $0x1d0] sm:$0xff] %v1509
    %1610 = vst [vmem:[#allocation2 + $0x1d8] sm:$0xff] %v1510
    %1611 = vst [vmem:[#allocation2 + $0x1e0] sm:$0xff] %v1511
    %1612 = vst [vmem:[#allocation2 + $0x1e8] sm:$0xff] %v1512
    %1613 = vst [vmem:[#allocation2 + $0x1f0] sm:$0xff] %v1513
    %1614 = vst [vmem:[#allocation2 + $0x1f8] sm:$0xff] %v1514
    %1615 = vst [vmem:[#allocation2 + $0x200] sm:$0xff] %v1515
    %1616 = vst [vmem:[#allocation2 + $0x208] sm:$0xff] %v1516
    %1617 = vst [vmem:[#allocation2 + $0x210] sm:$0xff] %v1517
    %1618 = vst [vmem:[#allocation2 + $0x218] sm:$0xff] %v1518
    %1619 = vst [vmem:[#allocation2 + $0x220] sm:$0xff] %v1519
    %1620 = vst [vmem:[#allocation2 + $0x228] sm:$0xff] %v1520
    %1621 = vst [vmem:[#allocation2 + $0x230] sm:$0xff] %v1521
    %1622 = vst [vmem:[#allocation2 + $0x238] sm:$0xff] %v1522
    %1623 = vst [vmem:[#allocation2 + $0x240] sm:$0xff] %v1523
    %1624 = vst [vmem:[#allocation2 + $0x248] sm:$0xff] %v1524
    %1625 = vst [vmem:[#allocation2 + $0x250] sm:$0xff] %v1525
    %1626 = vst [vmem:[#allocation2 + $0x258] sm:$0xff] %v1526
    %1627 = vst [vmem:[#allocation2 + $0x260] sm:$0xff] %v1527
    %1628 = vst [vmem:[#allocation2 + $0x268] sm:$0xff] %v1528
    %1629 = vst [vmem:[#allocation2 + $0x270] sm:$0xff] %v1529
    %1630 = vst [vmem:[#allocation2 + $0x278] sm:$0xff] %v1530
    %1631 = vst [vmem:[#allocation2 + $0x280] sm:$0xff] %v1531
    %1632 = vst [vmem:[#allocation2 + $0x288] sm:$0xff] %v1532
    %1633 = vst [vmem:[#allocation2 + $0x290] sm:$0xff] %v1533
    %1634 = vst [vmem:[#allocation2 + $0x298] sm:$0xff] %v1534
    %1635 = vst [vmem:[#allocation2 + $0x2a0] sm:$0xff] %v1535
    %1636 = vst [vmem:[#allocation2 + $0x2a8] sm:$0xff] %v1536
    %1637 = vst [vmem:[#allocation2 + $0x2b0] sm:$0xff] %v1537
    %1638 = vst [vmem:[#allocation2 + $0x2b8] sm:$0xff] %v1538
    %1639 = vst [vmem:[#allocation2 + $0x2c0] sm:$0xff] %v1539
    %1640 = vst [vmem:[#allocation2 + $0x2c8] sm:$0xff] %v1540
    %1641 = vst [vmem:[#allocation2 + $0x2d0] sm:$0xff] %v1541
    %1642 = vst [vmem:[#allocation2 + $0x2d8] sm:$0xff] %v1542
    %1643 = vst [vmem:[#allocation2 + $0x2e0] sm:$0xff] %v1543
    %1644 = vst [vmem:[#allocation2 + $0x2e8] sm:$0xff] %v1544
    %1645 = vst [vmem:[#allocation2 + $0x2f0] sm:$0xff] %v1545
    %1646 = vst [vmem:[#allocation2 + $0x2f8] sm:$0xff] %v1546
    %1647 = vst [vmem:[#allocation2 + $0x300] sm:$0xff] %v1547
    %1648 = vst [vmem:[#allocation2 + $0x308] sm:$0xff] %v1548
    %1649 = vst [vmem:[#allocation2 + $0x310] sm:$0xff] %v1549
    %1650 = vst [vmem:[#allocation2 + $0x318] sm:$0xff] %v1550
    // Predicated region
    $region14: #{_lambda_.1} parent=1 // pred_check
      _
    $region15: #{_lambda_.1} parent=1 // pred_check_branch
      %1652 = sbr.rel (0) target = $region17
    $region16: #{_lambda_.1} parent=1 // pred_region
      %s1654 = ssub.s32 12800, 12800
      %1655 = vsyncadd [#allocation3], %s1654
      %s1656 = sshll.u32 [#allocation2], 4
      %s1657 = int_to_ptr.vmem [resolvable:$true] %s1656
      %1662 = dma.vmem_to_hbm [thread:$0]  %s1657, 12800, %s3, [#allocation3], 256, 256, 16
    $region17: #{_lambda_.1} parent=1 // pred_fallthru
      _
    // Predicated region
    $region18: #{_lambda_.1} parent=1 // pred_check
      _
    $region19: #{_lambda_.1} parent=1 // pred_check_branch
      %1664 = sbr.rel (0) target = $region21
    $region20: #{_lambda_.1} parent=1 // pred_region
      %1665 = dma.done [#allocation3], 12800
    $region21: #{_lambda_.1} parent=1 // pred_fallthru
      _
    %1666 = vsyncpa [#allocation3], 1

</llo_original>
